<compile_context>
chip_gen: v5e
topology: v5e:2x2
jax: 0.10.0
libtpu: 0.0.40
codegen_flags: <defaults>
</compile_context>

<pallas_src>
import math

import jax
import jax.numpy as jnp
from jax.experimental import pallas as pl
from jax.experimental.pallas import tpu as pltpu


# ----------------------------- model config --------------------------------

LAYERS_CONFIG = [(3, 16), (16, 32), (32, 48), (48, 64), (64, 80),
                 (80, 96), (96, 112), (112, 128), (128, 144)]
NUM_HIDDEN = len(LAYERS_CONFIG) - 1      # 8 GCN+BN+ReLU layers
F_OUT = LAYERS_CONFIG[-1][1]             # 144 (per-head output width)
PAD = 128                                # lane-dense hidden feature width
HEAD_PAD = 384                           # [W_mean(144) | W_std(144) | 0-pad] -> 3*128
BN_EPS = 1e-5


# ----------------------------- Pallas kernel -------------------------------

def _vencoder_fused_kernel(x_ref, adj_ref, wstack_ref, whead_ref, out_ref):
    """Entire VEncoder forward for one graph, fully VMEM-resident.

    x_ref      : (N, 128)  f32   node features, zero-padded on feature axis
    adj_ref    : (N, N)    f32   dense (row-normalized) adjacency
    wstack_ref : (8,128,128) bf16 hidden GCN weights, zero-padded
    whead_ref  : (128,384) bf16  [W_mean | W_std | 0-pad]
    out_ref    : (N, 384)  f32   lane-dense packed (mean, std) head outputs
    """
    adj = adj_ref[...].astype(jnp.bfloat16)        # MXU operand, cast once
    h = x_ref[...]                                 # f32 activations (VPU path)
    n = h.shape[0]
    inv_n = 1.0 / n   # TRUE node count — N is never padded (BN batch stats!)

    # Unrolled layer loop: intermediates never leave VMEM/vregs.
    for i in range(NUM_HIDDEN):
        # (adj @ h) @ W  ==  adj @ (h @ W); bf16 MXU inputs, f32 accumulation.
        t = jnp.dot(adj, h.astype(jnp.bfloat16),
                    preferred_element_type=jnp.float32)
        t = jnp.dot(t.astype(jnp.bfloat16), wstack_ref[i],
                    preferred_element_type=jnp.float32)

        # BatchNorm1d(affine=False, track_running_stats=False): biased batch
        # stats over the node axis, single reduction pass, all f32.
        s = jnp.sum(t, axis=0, keepdims=True)
        ss = jnp.sum(t * t, axis=0, keepdims=True)
        mean = s * inv_n
        var = jnp.maximum(ss * inv_n - mean * mean, 0.0)
        t = (t - mean) * jax.lax.rsqrt(var + BN_EPS)   # rsqrt -> EUP slot
        h = jnp.maximum(t, 0.0)                        # ReLU

    # Fused mean/std heads (no norm, no activation): one 384-wide matmul.
    t = jnp.dot(adj, h.astype(jnp.bfloat16), preferred_element_type=jnp.float32)
    out_ref[...] = jnp.dot(t.astype(jnp.bfloat16), whead_ref[...],
                           preferred_element_type=jnp.float32)


# ----------------------------- wrappers -------------------------------------

def pack_params(params):
    """One-time zero-padding / stacking of weights into bf16 kernel operands."""
    ws = []
    for w in params["gcn"]:
        cin, cout = w.shape
        ws.append(jnp.pad(w, ((0, PAD - cin), (0, PAD - cout))))
    wstack = jnp.stack(ws).astype(jnp.bfloat16)              # (8, 128, 128)
    # NOTE: the zero-column invariant relies on no bias and affine=False BN.
    whead = jnp.zeros((PAD, HEAD_PAD), jnp.float32)
    whead = whead.at[:, :F_OUT].set(params["mean"])
    whead = whead.at[:, F_OUT:2 * F_OUT].set(params["std"])
    return wstack, whead.astype(jnp.bfloat16)                # (128, 384)


@jax.jit
def vencoder_forward_batched(wstack, whead, x, adj):
    """x: (G, N, F_in) f32, adj: (G, N, N) f32  ->  ((G,N,144), (G,N,144))."""
    g, n, f_in = x.shape
    x_pad = jnp.pad(x, ((0, 0), (0, 0), (0, PAD - f_in)))    # lane-dense input

    per_graph_flops = (NUM_HIDDEN * (2 * n * n * PAD + 2 * n * PAD * PAD
                                     + 6 * n * PAD)
                       + 2 * n * n * PAD + 2 * n * PAD * HEAD_PAD)
    cost = pl.CostEstimate(
        flops=g * per_graph_flops,
        transcendentals=g * NUM_HIDDEN * PAD,                # rsqrt per feature/layer
        bytes_accessed=(4 * g * n * PAD + 4 * g * n * n + 4 * g * n * HEAD_PAD
                        + 2 * (NUM_HIDDEN * PAD * PAD + PAD * HEAD_PAD)),
    )

    out = pl.pallas_call(
        _vencoder_fused_kernel,
        out_shape=jax.ShapeDtypeStruct((g, n, HEAD_PAD), jnp.float32),
        grid=(g,),                                           # one graph per step
        in_specs=[
            pl.BlockSpec((None, n, PAD), lambda i: (i, 0, 0)),           # x
            pl.BlockSpec((None, n, n), lambda i: (i, 0, 0)),             # adj
            pl.BlockSpec((NUM_HIDDEN, PAD, PAD), lambda i: (0, 0, 0)),   # hidden W (shared)
            pl.BlockSpec((PAD, HEAD_PAD), lambda i: (0, 0)),             # head W (shared)
        ],
        out_specs=pl.BlockSpec((None, n, HEAD_PAD), lambda i: (i, 0, 0)),
        compiler_params=pltpu.CompilerParams(
            dimension_semantics=("parallel",)),              # v7x: shard graphs over 2 TCs
        cost_estimate=cost,
    )(x_pad, adj, wstack, whead)

    # Lane-dense (G, N, 384) kernel output -> real (G, N, 144) heads.
    return out[..., :F_OUT], out[..., F_OUT:2 * F_OUT]


def vencoder_forward(wstack, whead, x, adj):
    """Single-graph (module-equivalent) entry point."""
    m, s = vencoder_forward_batched(wstack, whead, x[None], adj[None])
    return m[0], s[0]


# ----------------------------- params ---------------------------------------

def init_params(key):
    """Matches GCNLayer.reset_parameters: W ~ U(-1/sqrt(out), 1/sqrt(out)),
    shape (in, out), no bias."""
    params = {"gcn": [], "mean": None, "std": None}
    keys = jax.random.split(key, len(LAYERS_CONFIG) + 1)
    for k, (cin, cout) in zip(keys[:NUM_HIDDEN], LAYERS_CONFIG[:-1]):
        std = 1.0 / math.sqrt(cout)
        params["gcn"].append(
            jax.random.uniform(k, (cin, cout), jnp.float32, -std, std))
    cin, cout = LAYERS_CONFIG[-1]
    std = 1.0 / math.sqrt(cout)
    params["mean"] = jax.random.uniform(keys[-2], (cin, cout), jnp.float32, -std, std)
    params["std"] = jax.random.uniform(keys[-1], (cin, cout), jnp.float32, -std, std)
    return params


# --------------------------- pure-JAX reference -----------------------------

def _ref_forward(params, x, adj, mm_dtype=jnp.float32):
    """Pure-JAX reference of the PyTorch module for a single graph.

    mm_dtype=bf16 mirrors the kernel's MXU-input precision and association
    order exactly (tight structural check); mm_dtype=f32 is the full-precision
    PyTorch-faithful reference (loose sanity bound vs bf16 MXU rounding)."""
    def mm(a, b):
        return jnp.dot(a.astype(mm_dtype), b.astype(mm_dtype),
                       preferred_element_type=jnp.float32)

    def layer(h, w, norm_relu):
        out = mm(mm(adj, h), w)          # same association as the kernel
        if norm_relu:
            mean = out.mean(axis=0, keepdims=True)
            var = ((out - mean) ** 2).mean(axis=0, keepdims=True)
            out = (out - mean) / jnp.sqrt(var + BN_EPS)
            out = jnp.maximum(out, 0.0)
        return out

    h = x
    for w in params["gcn"]:
        h = layer(h, w, True)
    return layer(h, params["mean"], False), layer(h, params["std"], False)


# ---------------------------------- main -------------------------------------

if __name__ == "__main__":
    key = jax.random.PRNGKey(0)
    k_param, k_x, k_adj = jax.random.split(key, 3)

    N = 64   # nodes per graph
    G = 4    # graphs batched per pallas_call (amortizes launch overhead)
    params = init_params(k_param)
    wstack, whead = pack_params(params)

    x = jax.random.normal(k_x, (G, N, 3), jnp.float32)
    # Deterministic dense "adjacency": random graphs + self loops, row-normalized.
    a = (jax.random.uniform(k_adj, (G, N, N)) > 0.7).astype(jnp.float32)
    a = jnp.maximum(a, jnp.swapaxes(a, -1, -2)) + jnp.eye(N, dtype=jnp.float32)
    adj = a / jnp.sum(a, axis=-1, keepdims=True)

    # Batched path.
    x_mean, x_std = vencoder_forward_batched(wstack, whead, x, adj)
    jax.block_until_ready((x_mean, x_std))
    assert x_mean.shape == (G, N, F_OUT) and x_std.shape == (G, N, F_OUT)

    # Single-graph (module-equivalent) path.
    s_mean, s_std = vencoder_forward(wstack, whead, x[0], adj[0])
    jax.block_until_ready((s_mean, s_std))

    ok = True
    for gi in range(G):
        # Tight structural check vs a bf16-matmul-matched pure-JAX reference.
        rm_b, rs_b = _ref_forward(params, x[gi], adj[gi], mm_dtype=jnp.bfloat16)
        ok &= bool(jnp.allclose(x_mean[gi], rm_b, atol=2e-2, rtol=2e-2))
        ok &= bool(jnp.allclose(x_std[gi], rs_b, atol=2e-2, rtol=2e-2))
        # Loose sanity check vs the full-f32 reference (bf16 MXU rounding only).
        rm_f, rs_f = _ref_forward(params, x[gi], adj[gi], mm_dtype=jnp.float32)
        ok &= bool(jnp.max(jnp.abs(x_mean[gi] - rm_f)) < 0.25)
        ok &= bool(jnp.max(jnp.abs(x_std[gi] - rs_f)) < 0.25)

    rm0, rs0 = _ref_forward(params, x[0], adj[0], mm_dtype=jnp.bfloat16)
    ok &= bool(jnp.allclose(s_mean, rm0, atol=2e-2, rtol=2e-2))
    ok &= bool(jnp.allclose(s_std, rs0, atol=2e-2, rtol=2e-2))

    assert ok
    print("KERNEL_OK")
</pallas_src>

<mosaic_0001>
module attributes {stable_mosaic.version = 11 : i64} {
  func.func @_vencoder_fused_kernel(%arg0: i32, %arg1: memref<1x64x128xf32, #tpu.memory_space<vmem>>, %arg2: memref<1x64x64xf32, #tpu.memory_space<vmem>>, %arg3: memref<8x128x128xbf16, #tpu.memory_space<vmem>>, %arg4: memref<128x384xbf16, #tpu.memory_space<vmem>>, %arg5: memref<1x64x384xf32, #tpu.memory_space<vmem>>) attributes {dimension_semantics = [#tpu.dimension_semantics<parallel>], iteration_bounds = array<i64: 4>, scalar_prefetch = 0 : i64, scratch_operands = 0 : i64, tpu.core_type = #tpu.core_type<tc>, window_params = [{transform_indices = @transform_0, window_bounds = array<i64: 1, 64, 128>}, {transform_indices = @transform_1, window_bounds = array<i64: 1, 64, 64>}, {pipeline_mode = #tpu.pipeline_mode<synchronous>, transform_indices = @transform_2, window_bounds = array<i64: 8, 128, 128>}, {pipeline_mode = #tpu.pipeline_mode<synchronous>, transform_indices = @transform_3, window_bounds = array<i64: 128, 384>}, {transform_indices = @transform_4, window_bounds = array<i64: 1, 64, 384>}]} {
    %c0 = arith.constant 0 : index
    %c0_0 = arith.constant 0 : index
    %c0_1 = arith.constant 0 : index
    %0 = vector.load %arg2[%c0, %c0_0, %c0_1] : memref<1x64x64xf32, #tpu.memory_space<vmem>>, vector<1x64x64xf32>
    %1 = vector.shape_cast %0 : vector<1x64x64xf32> to vector<64x64xf32>
    %2 = arith.truncf %1 : vector<64x64xf32> to vector<64x64xbf16>
    %c0_2 = arith.constant 0 : index
    %c0_3 = arith.constant 0 : index
    %c0_4 = arith.constant 0 : index
    %3 = vector.load %arg1[%c0_2, %c0_3, %c0_4] : memref<1x64x128xf32, #tpu.memory_space<vmem>>, vector<1x64x128xf32>
    %4 = vector.shape_cast %3 : vector<1x64x128xf32> to vector<64x128xf32>
    %5 = arith.truncf %4 : vector<64x128xf32> to vector<64x128xbf16>
    %cst = arith.constant dense<0.000000e+00> : vector<64x128xf32>
    %6 = tpu.matmul %2, %5, %cst {dimension_numbers = #tpu.dot_dimension_numbers<[1], [0], [0], [1], [0, 0, 1, 1], [], []>} : vector<64x64xbf16>, vector<64x128xbf16>, vector<64x128xf32> -> vector<64x128xf32>
    %7 = arith.truncf %6 : vector<64x128xf32> to vector<64x128xbf16>
    %c0_5 = arith.constant 0 : index
    %c0_6 = arith.constant 0 : index
    %c0_7 = arith.constant 0 : index
    %8 = vector.load %arg3[%c0_5, %c0_6, %c0_7] : memref<8x128x128xbf16, #tpu.memory_space<vmem>>, vector<1x128x128xbf16>
    %9 = vector.shape_cast %8 : vector<1x128x128xbf16> to vector<128x128xbf16>
    %cst_8 = arith.constant dense<0.000000e+00> : vector<64x128xf32>
    %10 = tpu.matmul %7, %9, %cst_8 {dimension_numbers = #tpu.dot_dimension_numbers<[1], [0], [0], [1], [0, 0, 1, 1], [], []>} : vector<64x128xbf16>, vector<128x128xbf16>, vector<64x128xf32> -> vector<64x128xf32>
    %cst_9 = arith.constant dense<0.000000e+00> : vector<128xf32>
    %11 = vector.multi_reduction <add>, %10, %cst_9 [0] : vector<64x128xf32> to vector<128xf32>
    %12 = vector.shape_cast %11 : vector<128xf32> to vector<1x128xf32>
    %13 = arith.mulf %10, %10 : vector<64x128xf32>
    %cst_10 = arith.constant dense<0.000000e+00> : vector<128xf32>
    %14 = vector.multi_reduction <add>, %13, %cst_10 [0] : vector<64x128xf32> to vector<128xf32>
    %15 = vector.shape_cast %14 : vector<128xf32> to vector<1x128xf32>
    %cst_11 = arith.constant 1.562500e-02 : f32
    %16 = vector.broadcast %cst_11 : f32 to vector<1x128xf32>
    %17 = arith.mulf %12, %16 : vector<1x128xf32>
    %cst_12 = arith.constant 1.562500e-02 : f32
    %18 = vector.broadcast %cst_12 : f32 to vector<1x128xf32>
    %19 = arith.mulf %15, %18 : vector<1x128xf32>
    %20 = arith.mulf %17, %17 : vector<1x128xf32>
    %21 = arith.subf %19, %20 : vector<1x128xf32>
    %cst_13 = arith.constant 0.000000e+00 : f32
    %22 = vector.broadcast %cst_13 : f32 to vector<1x128xf32>
    %23 = arith.maximumf %21, %22 : vector<1x128xf32>
    %24 = vector.broadcast %17 : vector<1x128xf32> to vector<64x128xf32>
    %25 = arith.subf %10, %24 : vector<64x128xf32>
    %cst_14 = arith.constant 9.99999974E-6 : f32
    %26 = vector.broadcast %cst_14 : f32 to vector<1x128xf32>
    %27 = arith.addf %23, %26 : vector<1x128xf32>
    %28 = math.rsqrt %27 : vector<1x128xf32>
    %29 = vector.broadcast %28 : vector<1x128xf32> to vector<64x128xf32>
    %30 = arith.mulf %25, %29 : vector<64x128xf32>
    %cst_15 = arith.constant 0.000000e+00 : f32
    %31 = vector.broadcast %cst_15 : f32 to vector<64x128xf32>
    %32 = arith.maximumf %30, %31 : vector<64x128xf32>
    %33 = arith.truncf %32 : vector<64x128xf32> to vector<64x128xbf16>
    %cst_16 = arith.constant dense<0.000000e+00> : vector<64x128xf32>
    %34 = tpu.matmul %2, %33, %cst_16 {dimension_numbers = #tpu.dot_dimension_numbers<[1], [0], [0], [1], [0, 0, 1, 1], [], []>} : vector<64x64xbf16>, vector<64x128xbf16>, vector<64x128xf32> -> vector<64x128xf32>
    %35 = arith.truncf %34 : vector<64x128xf32> to vector<64x128xbf16>
    %c1 = arith.constant 1 : index
    %c0_17 = arith.constant 0 : index
    %c0_18 = arith.constant 0 : index
    %36 = vector.load %arg3[%c1, %c0_17, %c0_18] : memref<8x128x128xbf16, #tpu.memory_space<vmem>>, vector<1x128x128xbf16>
    %37 = vector.shape_cast %36 : vector<1x128x128xbf16> to vector<128x128xbf16>
    %cst_19 = arith.constant dense<0.000000e+00> : vector<64x128xf32>
    %38 = tpu.matmul %35, %37, %cst_19 {dimension_numbers = #tpu.dot_dimension_numbers<[1], [0], [0], [1], [0, 0, 1, 1], [], []>} : vector<64x128xbf16>, vector<128x128xbf16>, vector<64x128xf32> -> vector<64x128xf32>
    %cst_20 = arith.constant dense<0.000000e+00> : vector<128xf32>
    %39 = vector.multi_reduction <add>, %38, %cst_20 [0] : vector<64x128xf32> to vector<128xf32>
    %40 = vector.shape_cast %39 : vector<128xf32> to vector<1x128xf32>
    %41 = arith.mulf %38, %38 : vector<64x128xf32>
    %cst_21 = arith.constant dense<0.000000e+00> : vector<128xf32>
    %42 = vector.multi_reduction <add>, %41, %cst_21 [0] : vector<64x128xf32> to vector<128xf32>
    %43 = vector.shape_cast %42 : vector<128xf32> to vector<1x128xf32>
    %cst_22 = arith.constant 1.562500e-02 : f32
    %44 = vector.broadcast %cst_22 : f32 to vector<1x128xf32>
    %45 = arith.mulf %40, %44 : vector<1x128xf32>
    %cst_23 = arith.constant 1.562500e-02 : f32
    %46 = vector.broadcast %cst_23 : f32 to vector<1x128xf32>
    %47 = arith.mulf %43, %46 : vector<1x128xf32>
    %48 = arith.mulf %45, %45 : vector<1x128xf32>
    %49 = arith.subf %47, %48 : vector<1x128xf32>
    %cst_24 = arith.constant 0.000000e+00 : f32
    %50 = vector.broadcast %cst_24 : f32 to vector<1x128xf32>
    %51 = arith.maximumf %49, %50 : vector<1x128xf32>
    %52 = vector.broadcast %45 : vector<1x128xf32> to vector<64x128xf32>
    %53 = arith.subf %38, %52 : vector<64x128xf32>
    %cst_25 = arith.constant 9.99999974E-6 : f32
    %54 = vector.broadcast %cst_25 : f32 to vector<1x128xf32>
    %55 = arith.addf %51, %54 : vector<1x128xf32>
    %56 = math.rsqrt %55 : vector<1x128xf32>
    %57 = vector.broadcast %56 : vector<1x128xf32> to vector<64x128xf32>
    %58 = arith.mulf %53, %57 : vector<64x128xf32>
    %cst_26 = arith.constant 0.000000e+00 : f32
    %59 = vector.broadcast %cst_26 : f32 to vector<64x128xf32>
    %60 = arith.maximumf %58, %59 : vector<64x128xf32>
    %61 = arith.truncf %60 : vector<64x128xf32> to vector<64x128xbf16>
    %cst_27 = arith.constant dense<0.000000e+00> : vector<64x128xf32>
    %62 = tpu.matmul %2, %61, %cst_27 {dimension_numbers = #tpu.dot_dimension_numbers<[1], [0], [0], [1], [0, 0, 1, 1], [], []>} : vector<64x64xbf16>, vector<64x128xbf16>, vector<64x128xf32> -> vector<64x128xf32>
    %63 = arith.truncf %62 : vector<64x128xf32> to vector<64x128xbf16>
    %c2 = arith.constant 2 : index
    %c0_28 = arith.constant 0 : index
    %c0_29 = arith.constant 0 : index
    %64 = vector.load %arg3[%c2, %c0_28, %c0_29] : memref<8x128x128xbf16, #tpu.memory_space<vmem>>, vector<1x128x128xbf16>
    %65 = vector.shape_cast %64 : vector<1x128x128xbf16> to vector<128x128xbf16>
    %cst_30 = arith.constant dense<0.000000e+00> : vector<64x128xf32>
    %66 = tpu.matmul %63, %65, %cst_30 {dimension_numbers = #tpu.dot_dimension_numbers<[1], [0], [0], [1], [0, 0, 1, 1], [], []>} : vector<64x128xbf16>, vector<128x128xbf16>, vector<64x128xf32> -> vector<64x128xf32>
    %cst_31 = arith.constant dense<0.000000e+00> : vector<128xf32>
    %67 = vector.multi_reduction <add>, %66, %cst_31 [0] : vector<64x128xf32> to vector<128xf32>
    %68 = vector.shape_cast %67 : vector<128xf32> to vector<1x128xf32>
    %69 = arith.mulf %66, %66 : vector<64x128xf32>
    %cst_32 = arith.constant dense<0.000000e+00> : vector<128xf32>
    %70 = vector.multi_reduction <add>, %69, %cst_32 [0] : vector<64x128xf32> to vector<128xf32>
    %71 = vector.shape_cast %70 : vector<128xf32> to vector<1x128xf32>
    %cst_33 = arith.constant 1.562500e-02 : f32
    %72 = vector.broadcast %cst_33 : f32 to vector<1x128xf32>
    %73 = arith.mulf %68, %72 : vector<1x128xf32>
    %cst_34 = arith.constant 1.562500e-02 : f32
    %74 = vector.broadcast %cst_34 : f32 to vector<1x128xf32>
    %75 = arith.mulf %71, %74 : vector<1x128xf32>
    %76 = arith.mulf %73, %73 : vector<1x128xf32>
    %77 = arith.subf %75, %76 : vector<1x128xf32>
    %cst_35 = arith.constant 0.000000e+00 : f32
    %78 = vector.broadcast %cst_35 : f32 to vector<1x128xf32>
    %79 = arith.maximumf %77, %78 : vector<1x128xf32>
    %80 = vector.broadcast %73 : vector<1x128xf32> to vector<64x128xf32>
    %81 = arith.subf %66, %80 : vector<64x128xf32>
    %cst_36 = arith.constant 9.99999974E-6 : f32
    %82 = vector.broadcast %cst_36 : f32 to vector<1x128xf32>
    %83 = arith.addf %79, %82 : vector<1x128xf32>
    %84 = math.rsqrt %83 : vector<1x128xf32>
    %85 = vector.broadcast %84 : vector<1x128xf32> to vector<64x128xf32>
    %86 = arith.mulf %81, %85 : vector<64x128xf32>
    %cst_37 = arith.constant 0.000000e+00 : f32
    %87 = vector.broadcast %cst_37 : f32 to vector<64x128xf32>
    %88 = arith.maximumf %86, %87 : vector<64x128xf32>
    %89 = arith.truncf %88 : vector<64x128xf32> to vector<64x128xbf16>
    %cst_38 = arith.constant dense<0.000000e+00> : vector<64x128xf32>
    %90 = tpu.matmul %2, %89, %cst_38 {dimension_numbers = #tpu.dot_dimension_numbers<[1], [0], [0], [1], [0, 0, 1, 1], [], []>} : vector<64x64xbf16>, vector<64x128xbf16>, vector<64x128xf32> -> vector<64x128xf32>
    %91 = arith.truncf %90 : vector<64x128xf32> to vector<64x128xbf16>
    %c3 = arith.constant 3 : index
    %c0_39 = arith.constant 0 : index
    %c0_40 = arith.constant 0 : index
    %92 = vector.load %arg3[%c3, %c0_39, %c0_40] : memref<8x128x128xbf16, #tpu.memory_space<vmem>>, vector<1x128x128xbf16>
    %93 = vector.shape_cast %92 : vector<1x128x128xbf16> to vector<128x128xbf16>
    %cst_41 = arith.constant dense<0.000000e+00> : vector<64x128xf32>
    %94 = tpu.matmul %91, %93, %cst_41 {dimension_numbers = #tpu.dot_dimension_numbers<[1], [0], [0], [1], [0, 0, 1, 1], [], []>} : vector<64x128xbf16>, vector<128x128xbf16>, vector<64x128xf32> -> vector<64x128xf32>
    %cst_42 = arith.constant dense<0.000000e+00> : vector<128xf32>
    %95 = vector.multi_reduction <add>, %94, %cst_42 [0] : vector<64x128xf32> to vector<128xf32>
    %96 = vector.shape_cast %95 : vector<128xf32> to vector<1x128xf32>
    %97 = arith.mulf %94, %94 : vector<64x128xf32>
    %cst_43 = arith.constant dense<0.000000e+00> : vector<128xf32>
    %98 = vector.multi_reduction <add>, %97, %cst_43 [0] : vector<64x128xf32> to vector<128xf32>
    %99 = vector.shape_cast %98 : vector<128xf32> to vector<1x128xf32>
    %cst_44 = arith.constant 1.562500e-02 : f32
    %100 = vector.broadcast %cst_44 : f32 to vector<1x128xf32>
    %101 = arith.mulf %96, %100 : vector<1x128xf32>
    %cst_45 = arith.constant 1.562500e-02 : f32
    %102 = vector.broadcast %cst_45 : f32 to vector<1x128xf32>
    %103 = arith.mulf %99, %102 : vector<1x128xf32>
    %104 = arith.mulf %101, %101 : vector<1x128xf32>
    %105 = arith.subf %103, %104 : vector<1x128xf32>
    %cst_46 = arith.constant 0.000000e+00 : f32
    %106 = vector.broadcast %cst_46 : f32 to vector<1x128xf32>
    %107 = arith.maximumf %105, %106 : vector<1x128xf32>
    %108 = vector.broadcast %101 : vector<1x128xf32> to vector<64x128xf32>
    %109 = arith.subf %94, %108 : vector<64x128xf32>
    %cst_47 = arith.constant 9.99999974E-6 : f32
    %110 = vector.broadcast %cst_47 : f32 to vector<1x128xf32>
    %111 = arith.addf %107, %110 : vector<1x128xf32>
    %112 = math.rsqrt %111 : vector<1x128xf32>
    %113 = vector.broadcast %112 : vector<1x128xf32> to vector<64x128xf32>
    %114 = arith.mulf %109, %113 : vector<64x128xf32>
    %cst_48 = arith.constant 0.000000e+00 : f32
    %115 = vector.broadcast %cst_48 : f32 to vector<64x128xf32>
    %116 = arith.maximumf %114, %115 : vector<64x128xf32>
    %117 = arith.truncf %116 : vector<64x128xf32> to vector<64x128xbf16>
    %cst_49 = arith.constant dense<0.000000e+00> : vector<64x128xf32>
    %118 = tpu.matmul %2, %117, %cst_49 {dimension_numbers = #tpu.dot_dimension_numbers<[1], [0], [0], [1], [0, 0, 1, 1], [], []>} : vector<64x64xbf16>, vector<64x128xbf16>, vector<64x128xf32> -> vector<64x128xf32>
    %119 = arith.truncf %118 : vector<64x128xf32> to vector<64x128xbf16>
    %c4 = arith.constant 4 : index
    %c0_50 = arith.constant 0 : index
    %c0_51 = arith.constant 0 : index
    %120 = vector.load %arg3[%c4, %c0_50, %c0_51] : memref<8x128x128xbf16, #tpu.memory_space<vmem>>, vector<1x128x128xbf16>
    %121 = vector.shape_cast %120 : vector<1x128x128xbf16> to vector<128x128xbf16>
    %cst_52 = arith.constant dense<0.000000e+00> : vector<64x128xf32>
    %122 = tpu.matmul %119, %121, %cst_52 {dimension_numbers = #tpu.dot_dimension_numbers<[1], [0], [0], [1], [0, 0, 1, 1], [], []>} : vector<64x128xbf16>, vector<128x128xbf16>, vector<64x128xf32> -> vector<64x128xf32>
    %cst_53 = arith.constant dense<0.000000e+00> : vector<128xf32>
    %123 = vector.multi_reduction <add>, %122, %cst_53 [0] : vector<64x128xf32> to vector<128xf32>
    %124 = vector.shape_cast %123 : vector<128xf32> to vector<1x128xf32>
    %125 = arith.mulf %122, %122 : vector<64x128xf32>
    %cst_54 = arith.constant dense<0.000000e+00> : vector<128xf32>
    %126 = vector.multi_reduction <add>, %125, %cst_54 [0] : vector<64x128xf32> to vector<128xf32>
    %127 = vector.shape_cast %126 : vector<128xf32> to vector<1x128xf32>
    %cst_55 = arith.constant 1.562500e-02 : f32
    %128 = vector.broadcast %cst_55 : f32 to vector<1x128xf32>
    %129 = arith.mulf %124, %128 : vector<1x128xf32>
    %cst_56 = arith.constant 1.562500e-02 : f32
    %130 = vector.broadcast %cst_56 : f32 to vector<1x128xf32>
    %131 = arith.mulf %127, %130 : vector<1x128xf32>
    %132 = arith.mulf %129, %129 : vector<1x128xf32>
    %133 = arith.subf %131, %132 : vector<1x128xf32>
    %cst_57 = arith.constant 0.000000e+00 : f32
    %134 = vector.broadcast %cst_57 : f32 to vector<1x128xf32>
    %135 = arith.maximumf %133, %134 : vector<1x128xf32>
    %136 = vector.broadcast %129 : vector<1x128xf32> to vector<64x128xf32>
    %137 = arith.subf %122, %136 : vector<64x128xf32>
    %cst_58 = arith.constant 9.99999974E-6 : f32
    %138 = vector.broadcast %cst_58 : f32 to vector<1x128xf32>
    %139 = arith.addf %135, %138 : vector<1x128xf32>
    %140 = math.rsqrt %139 : vector<1x128xf32>
    %141 = vector.broadcast %140 : vector<1x128xf32> to vector<64x128xf32>
    %142 = arith.mulf %137, %141 : vector<64x128xf32>
    %cst_59 = arith.constant 0.000000e+00 : f32
    %143 = vector.broadcast %cst_59 : f32 to vector<64x128xf32>
    %144 = arith.maximumf %142, %143 : vector<64x128xf32>
    %145 = arith.truncf %144 : vector<64x128xf32> to vector<64x128xbf16>
    %cst_60 = arith.constant dense<0.000000e+00> : vector<64x128xf32>
    %146 = tpu.matmul %2, %145, %cst_60 {dimension_numbers = #tpu.dot_dimension_numbers<[1], [0], [0], [1], [0, 0, 1, 1], [], []>} : vector<64x64xbf16>, vector<64x128xbf16>, vector<64x128xf32> -> vector<64x128xf32>
    %147 = arith.truncf %146 : vector<64x128xf32> to vector<64x128xbf16>
    %c5 = arith.constant 5 : index
    %c0_61 = arith.constant 0 : index
    %c0_62 = arith.constant 0 : index
    %148 = vector.load %arg3[%c5, %c0_61, %c0_62] : memref<8x128x128xbf16, #tpu.memory_space<vmem>>, vector<1x128x128xbf16>
    %149 = vector.shape_cast %148 : vector<1x128x128xbf16> to vector<128x128xbf16>
    %cst_63 = arith.constant dense<0.000000e+00> : vector<64x128xf32>
    %150 = tpu.matmul %147, %149, %cst_63 {dimension_numbers = #tpu.dot_dimension_numbers<[1], [0], [0], [1], [0, 0, 1, 1], [], []>} : vector<64x128xbf16>, vector<128x128xbf16>, vector<64x128xf32> -> vector<64x128xf32>
    %cst_64 = arith.constant dense<0.000000e+00> : vector<128xf32>
    %151 = vector.multi_reduction <add>, %150, %cst_64 [0] : vector<64x128xf32> to vector<128xf32>
    %152 = vector.shape_cast %151 : vector<128xf32> to vector<1x128xf32>
    %153 = arith.mulf %150, %150 : vector<64x128xf32>
    %cst_65 = arith.constant dense<0.000000e+00> : vector<128xf32>
    %154 = vector.multi_reduction <add>, %153, %cst_65 [0] : vector<64x128xf32> to vector<128xf32>
    %155 = vector.shape_cast %154 : vector<128xf32> to vector<1x128xf32>
    %cst_66 = arith.constant 1.562500e-02 : f32
    %156 = vector.broadcast %cst_66 : f32 to vector<1x128xf32>
    %157 = arith.mulf %152, %156 : vector<1x128xf32>
    %cst_67 = arith.constant 1.562500e-02 : f32
    %158 = vector.broadcast %cst_67 : f32 to vector<1x128xf32>
    %159 = arith.mulf %155, %158 : vector<1x128xf32>
    %160 = arith.mulf %157, %157 : vector<1x128xf32>
    %161 = arith.subf %159, %160 : vector<1x128xf32>
    %cst_68 = arith.constant 0.000000e+00 : f32
    %162 = vector.broadcast %cst_68 : f32 to vector<1x128xf32>
    %163 = arith.maximumf %161, %162 : vector<1x128xf32>
    %164 = vector.broadcast %157 : vector<1x128xf32> to vector<64x128xf32>
    %165 = arith.subf %150, %164 : vector<64x128xf32>
    %cst_69 = arith.constant 9.99999974E-6 : f32
    %166 = vector.broadcast %cst_69 : f32 to vector<1x128xf32>
    %167 = arith.addf %163, %166 : vector<1x128xf32>
    %168 = math.rsqrt %167 : vector<1x128xf32>
    %169 = vector.broadcast %168 : vector<1x128xf32> to vector<64x128xf32>
    %170 = arith.mulf %165, %169 : vector<64x128xf32>
    %cst_70 = arith.constant 0.000000e+00 : f32
    %171 = vector.broadcast %cst_70 : f32 to vector<64x128xf32>
    %172 = arith.maximumf %170, %171 : vector<64x128xf32>
    %173 = arith.truncf %172 : vector<64x128xf32> to vector<64x128xbf16>
    %cst_71 = arith.constant dense<0.000000e+00> : vector<64x128xf32>
    %174 = tpu.matmul %2, %173, %cst_71 {dimension_numbers = #tpu.dot_dimension_numbers<[1], [0], [0], [1], [0, 0, 1, 1], [], []>} : vector<64x64xbf16>, vector<64x128xbf16>, vector<64x128xf32> -> vector<64x128xf32>
    %175 = arith.truncf %174 : vector<64x128xf32> to vector<64x128xbf16>
    %c6 = arith.constant 6 : index
    %c0_72 = arith.constant 0 : index
    %c0_73 = arith.constant 0 : index
    %176 = vector.load %arg3[%c6, %c0_72, %c0_73] : memref<8x128x128xbf16, #tpu.memory_space<vmem>>, vector<1x128x128xbf16>
    %177 = vector.shape_cast %176 : vector<1x128x128xbf16> to vector<128x128xbf16>
    %cst_74 = arith.constant dense<0.000000e+00> : vector<64x128xf32>
    %178 = tpu.matmul %175, %177, %cst_74 {dimension_numbers = #tpu.dot_dimension_numbers<[1], [0], [0], [1], [0, 0, 1, 1], [], []>} : vector<64x128xbf16>, vector<128x128xbf16>, vector<64x128xf32> -> vector<64x128xf32>
    %cst_75 = arith.constant dense<0.000000e+00> : vector<128xf32>
    %179 = vector.multi_reduction <add>, %178, %cst_75 [0] : vector<64x128xf32> to vector<128xf32>
    %180 = vector.shape_cast %179 : vector<128xf32> to vector<1x128xf32>
    %181 = arith.mulf %178, %178 : vector<64x128xf32>
    %cst_76 = arith.constant dense<0.000000e+00> : vector<128xf32>
    %182 = vector.multi_reduction <add>, %181, %cst_76 [0] : vector<64x128xf32> to vector<128xf32>
    %183 = vector.shape_cast %182 : vector<128xf32> to vector<1x128xf32>
    %cst_77 = arith.constant 1.562500e-02 : f32
    %184 = vector.broadcast %cst_77 : f32 to vector<1x128xf32>
    %185 = arith.mulf %180, %184 : vector<1x128xf32>
    %cst_78 = arith.constant 1.562500e-02 : f32
    %186 = vector.broadcast %cst_78 : f32 to vector<1x128xf32>
    %187 = arith.mulf %183, %186 : vector<1x128xf32>
    %188 = arith.mulf %185, %185 : vector<1x128xf32>
    %189 = arith.subf %187, %188 : vector<1x128xf32>
    %cst_79 = arith.constant 0.000000e+00 : f32
    %190 = vector.broadcast %cst_79 : f32 to vector<1x128xf32>
    %191 = arith.maximumf %189, %190 : vector<1x128xf32>
    %192 = vector.broadcast %185 : vector<1x128xf32> to vector<64x128xf32>
    %193 = arith.subf %178, %192 : vector<64x128xf32>
    %cst_80 = arith.constant 9.99999974E-6 : f32
    %194 = vector.broadcast %cst_80 : f32 to vector<1x128xf32>
    %195 = arith.addf %191, %194 : vector<1x128xf32>
    %196 = math.rsqrt %195 : vector<1x128xf32>
    %197 = vector.broadcast %196 : vector<1x128xf32> to vector<64x128xf32>
    %198 = arith.mulf %193, %197 : vector<64x128xf32>
    %cst_81 = arith.constant 0.000000e+00 : f32
    %199 = vector.broadcast %cst_81 : f32 to vector<64x128xf32>
    %200 = arith.maximumf %198, %199 : vector<64x128xf32>
    %201 = arith.truncf %200 : vector<64x128xf32> to vector<64x128xbf16>
    %cst_82 = arith.constant dense<0.000000e+00> : vector<64x128xf32>
    %202 = tpu.matmul %2, %201, %cst_82 {dimension_numbers = #tpu.dot_dimension_numbers<[1], [0], [0], [1], [0, 0, 1, 1], [], []>} : vector<64x64xbf16>, vector<64x128xbf16>, vector<64x128xf32> -> vector<64x128xf32>
    %203 = arith.truncf %202 : vector<64x128xf32> to vector<64x128xbf16>
    %c7 = arith.constant 7 : index
    %c0_83 = arith.constant 0 : index
    %c0_84 = arith.constant 0 : index
    %204 = vector.load %arg3[%c7, %c0_83, %c0_84] : memref<8x128x128xbf16, #tpu.memory_space<vmem>>, vector<1x128x128xbf16>
    %205 = vector.shape_cast %204 : vector<1x128x128xbf16> to vector<128x128xbf16>
    %cst_85 = arith.constant dense<0.000000e+00> : vector<64x128xf32>
    %206 = tpu.matmul %203, %205, %cst_85 {dimension_numbers = #tpu.dot_dimension_numbers<[1], [0], [0], [1], [0, 0, 1, 1], [], []>} : vector<64x128xbf16>, vector<128x128xbf16>, vector<64x128xf32> -> vector<64x128xf32>
    %cst_86 = arith.constant dense<0.000000e+00> : vector<128xf32>
    %207 = vector.multi_reduction <add>, %206, %cst_86 [0] : vector<64x128xf32> to vector<128xf32>
    %208 = vector.shape_cast %207 : vector<128xf32> to vector<1x128xf32>
    %209 = arith.mulf %206, %206 : vector<64x128xf32>
    %cst_87 = arith.constant dense<0.000000e+00> : vector<128xf32>
    %210 = vector.multi_reduction <add>, %209, %cst_87 [0] : vector<64x128xf32> to vector<128xf32>
    %211 = vector.shape_cast %210 : vector<128xf32> to vector<1x128xf32>
    %cst_88 = arith.constant 1.562500e-02 : f32
    %212 = vector.broadcast %cst_88 : f32 to vector<1x128xf32>
    %213 = arith.mulf %208, %212 : vector<1x128xf32>
    %cst_89 = arith.constant 1.562500e-02 : f32
    %214 = vector.broadcast %cst_89 : f32 to vector<1x128xf32>
    %215 = arith.mulf %211, %214 : vector<1x128xf32>
    %216 = arith.mulf %213, %213 : vector<1x128xf32>
    %217 = arith.subf %215, %216 : vector<1x128xf32>
    %cst_90 = arith.constant 0.000000e+00 : f32
    %218 = vector.broadcast %cst_90 : f32 to vector<1x128xf32>
    %219 = arith.maximumf %217, %218 : vector<1x128xf32>
    %220 = vector.broadcast %213 : vector<1x128xf32> to vector<64x128xf32>
    %221 = arith.subf %206, %220 : vector<64x128xf32>
    %cst_91 = arith.constant 9.99999974E-6 : f32
    %222 = vector.broadcast %cst_91 : f32 to vector<1x128xf32>
    %223 = arith.addf %219, %222 : vector<1x128xf32>
    %224 = math.rsqrt %223 : vector<1x128xf32>
    %225 = vector.broadcast %224 : vector<1x128xf32> to vector<64x128xf32>
    %226 = arith.mulf %221, %225 : vector<64x128xf32>
    %cst_92 = arith.constant 0.000000e+00 : f32
    %227 = vector.broadcast %cst_92 : f32 to vector<64x128xf32>
    %228 = arith.maximumf %226, %227 : vector<64x128xf32>
    %229 = arith.truncf %228 : vector<64x128xf32> to vector<64x128xbf16>
    %cst_93 = arith.constant dense<0.000000e+00> : vector<64x128xf32>
    %230 = tpu.matmul %2, %229, %cst_93 {dimension_numbers = #tpu.dot_dimension_numbers<[1], [0], [0], [1], [0, 0, 1, 1], [], []>} : vector<64x64xbf16>, vector<64x128xbf16>, vector<64x128xf32> -> vector<64x128xf32>
    %231 = arith.truncf %230 : vector<64x128xf32> to vector<64x128xbf16>
    %c0_94 = arith.constant 0 : index
    %c0_95 = arith.constant 0 : index
    %232 = vector.load %arg4[%c0_94, %c0_95] : memref<128x384xbf16, #tpu.memory_space<vmem>>, vector<128x384xbf16>
    %cst_96 = arith.constant dense<0.000000e+00> : vector<64x384xf32>
    %233 = tpu.matmul %231, %232, %cst_96 {dimension_numbers = #tpu.dot_dimension_numbers<[1], [0], [0], [1], [0, 0, 1, 1], [], []>} : vector<64x128xbf16>, vector<128x384xbf16>, vector<64x384xf32> -> vector<64x384xf32>
    %c0_97 = arith.constant 0 : index
    %c0_98 = arith.constant 0 : index
    %c0_99 = arith.constant 0 : index
    %234 = vector.load %arg5[%c0_97, %c0_98, %c0_99] : memref<1x64x384xf32, #tpu.memory_space<vmem>>, vector<1x64x384xf32>
    %235 = vector.shape_cast %234 : vector<1x64x384xf32> to vector<64x384xf32>
    %236 = vector.shape_cast %233 : vector<64x384xf32> to vector<1x64x384xf32>
    tpu.vector_store %arg5[%c0_97, %c0_98, %c0_99], %236 {strides = array<i32>} : memref<1x64x384xf32, #tpu.memory_space<vmem>>, vector<1x64x384xf32>,
    return
  }
  func.func @transform_0(%arg0: i32) -> (i32, i32, i32) {
    %c0_i32 = arith.constant 0 : i32
    %c0_i32_0 = arith.constant 0 : i32
    %c0_i32_1 = arith.constant 0 : i32
    return %arg0, %c0_i32, %c0_i32_0 : i32, i32, i32
  }
  func.func @transform_1(%arg0: i32) -> (i32, i32, i32) {
    %c0_i32 = arith.constant 0 : i32
    %c0_i32_0 = arith.constant 0 : i32
    %c0_i32_1 = arith.constant 0 : i32
    return %arg0, %c0_i32, %c0_i32_0 : i32, i32, i32
  }
  func.func @transform_2(%arg0: i32) -> (i32, i32, i32) {
    %c0_i32 = arith.constant 0 : i32
    %c0_i32_0 = arith.constant 0 : i32
    %c0_i32_1 = arith.constant 0 : i32
    %c0_i32_2 = arith.constant 0 : i32
    return %c0_i32, %c0_i32_0, %c0_i32_1 : i32, i32, i32
  }
  func.func @transform_3(%arg0: i32) -> (i32, i32) {
    %c0_i32 = arith.constant 0 : i32
    %c0_i32_0 = arith.constant 0 : i32
    %c0_i32_1 = arith.constant 0 : i32
    return %c0_i32, %c0_i32_0 : i32, i32
  }
  func.func @transform_4(%arg0: i32) -> (i32, i32, i32) {
    %c0_i32 = arith.constant 0 : i32
    %c0_i32_0 = arith.constant 0 : i32
    %c0_i32_1 = arith.constant 0 : i32
    return %arg0, %c0_i32, %c0_i32_0 : i32, i32, i32
  }
}

</mosaic_0001>

<llo_original>
// kernel: vencoder_forward_batched.1
$region0: #{vencoder_forward_batched.1}
  #allocation0 [shape = 'u32[]', space=smem, size = 0x4, offset = 0x4, fixed_abs, tag = 'smem constant byte address 0x4 - core index']
  #allocation1 [shape = 'u32[72,128]{1,0:T(1,128)}', space=vmem, size = 0x9000, scoped, tag = 'internal scratch']
  %s0 = inlined_call_operand.vmem [shape: f32[4,64,128], index: 0, kind: input, shape index: {}]
  %s1 = inlined_call_operand.vmem [shape: f32[4,64,64], index: 1, kind: input, shape index: {}]
  %s2 = inlined_call_operand.vmem [shape: bf16[8,128,128], index: 2, kind: input, shape index: {}]
  %s3 = inlined_call_operand.hbm [shape: bf16[128,384], index: 3, kind: input, shape index: {}]
  %s4 = inlined_call_operand.vmem [shape: f32[4,64,384], index: 4, kind: output, shape index: {}]
  %s5 = sld [smem:[#allocation0]]
  $region53: #{vencoder_forward_batched.1} parent=0
    _
  %s7 = ssub.s32 1, %s5
  %s8 = scalar_select 0, %s7, %s5
  $region1: #{vencoder_forward_batched.1} parent=0
    #allocation2 [shape = 'u8[98304]{0}', space=vmem, size = 0x18000, scoped, tag = 'input window, operand 3, single buffered']
    #allocation3 [shape = 's32[2]{0}', space=sflag, size = 0x8, scoped, tag = 'scoped memory for vencoder_forward_batched.1']
    %9 = vsyncpa [#allocation3], 0
    loop: start=0, step=1, limit=6
    $region2: #{vencoder_forward_batched.1} parent=1 // loop_pre_header
      _
    $region3: #{vencoder_forward_batched.1} parent=1 // loop_header
      %s11 = sphi 0, %s15
      %p12 = scmp.ge.s32.totalorder %s11, 6
      %s21 = sphi 0, %s23
      %s24 = sphi 0, %s21
      %s25 = sphi 0, %s24
      %s41 = sphi 0, %s25
      %s47 = sphi 0, %s49
      %s50 = sphi 0, %s47
      %s51 = sphi 0, %s50
      %s67 = sphi 0, %s51
      %s71 = sphi 0, %s71
      %s73 = sphi 0, %s71
      %s74 = sphi 0, %s73
      %s88 = sphi 0, %s74
      %s92 = sphi 0, %s92
      %s94 = sphi 0, %s92
      %s95 = sphi 0, %s94
      %s109 = sphi 0, %s95
      %s115 = sphi 0, %s117
      %s118 = sphi 0, %s115
      %s119 = sphi 0, %s118
      %s135 = sphi 0, %s119
    $region4: #{vencoder_forward_batched.1} parent=1 // loop_header_branch
      %14 = sbr.rel (%p12) target = $region8
    $region5: #{vencoder_forward_batched.1} parent=1 // loop_body
      %s16 = ssub.s32 %s11, 1
      %s17 = ssub.s32 %s11, 2
      %s18 = sadd.s32 %s11, 1
      %s19 = ssub.s32 %s11, %s18
      %p20 = scmp.eq.s32.totalorder %s19, 0
      %s22 = sadd.s32 %s21, 1
      %s23 = scalar_select %p20, %s21, %s22
      %p26 = pneg %p20
      %p27 = scmp.eq.s32.totalorder %s11, 3
      %p28 = por %p26, %p27
      %p29 = scmp.ne.s32.totalorder %s21, %s24
      %p30 = scmp.eq.s32.totalorder %s11, 0
      %p31 = por %p29, %p30
      %p32 = scmp.ne.s32.totalorder %s21, %s24
      %p33 = scmp.eq.s32.totalorder %s16, 3
      %p34 = por %p32, %p33
      %p35 = scmp.ne.s32.totalorder %s24, %s25
      %p36 = scmp.eq.s32.totalorder %s16, 0
      %p37 = por %p35, %p36
      %p38 = scmp.ne.s32.totalorder %s24, %s25
      %p39 = scmp.eq.s32.totalorder %s17, 3
      %p40 = por %p38, %p39
      %p42 = scmp.ne.s32.totalorder %s25, %s41
      %p43 = scmp.eq.s32.totalorder %s17, 0
      %p44 = por %p42, %p43
      %s45 = ssub.s32 %s11, %s18
      %p46 = scmp.eq.s32.totalorder %s45, 0
      %s48 = sadd.s32 %s47, 1
      %s49 = scalar_select %p46, %s47, %s48
      %p52 = pneg %p46
      %p53 = scmp.eq.s32.totalorder %s11, 3
      %p54 = por %p52, %p53
      %p55 = scmp.ne.s32.totalorder %s47, %s50
      %p56 = scmp.eq.s32.totalorder %s11, 0
      %p57 = por %p55, %p56
      %p58 = scmp.ne.s32.totalorder %s47, %s50
      %p59 = scmp.eq.s32.totalorder %s16, 3
      %p60 = por %p58, %p59
      %p61 = scmp.ne.s32.totalorder %s50, %s51
      %p62 = scmp.eq.s32.totalorder %s16, 0
      %p63 = por %p61, %p62
      %p64 = scmp.ne.s32.totalorder %s50, %s51
      %p65 = scmp.eq.s32.totalorder %s17, 3
      %p66 = por %p64, %p65
      %p68 = scmp.ne.s32.totalorder %s51, %s67
      %p69 = scmp.eq.s32.totalorder %s17, 0
      %p70 = por %p68, %p69
      %s72 = sadd.s32 %s71, 1
      %p75 = scmp.eq.s32.totalorder %s11, 3
      %p76 = scmp.ne.s32.totalorder %s71, %s73
      %p77 = scmp.eq.s32.totalorder %s11, 0
      %p78 = por %p76, %p77
      %p79 = scmp.ne.s32.totalorder %s71, %s73
      %p80 = scmp.eq.s32.totalorder %s16, 3
      %p81 = por %p79, %p80
      %p82 = scmp.ne.s32.totalorder %s73, %s74
      %p83 = scmp.eq.s32.totalorder %s16, 0
      %p84 = por %p82, %p83
      %p85 = scmp.ne.s32.totalorder %s73, %s74
      %p86 = scmp.eq.s32.totalorder %s17, 3
      %p87 = por %p85, %p86
      %p89 = scmp.ne.s32.totalorder %s74, %s88
      %p90 = scmp.eq.s32.totalorder %s17, 0
      %p91 = por %p89, %p90
      %s93 = sadd.s32 %s92, 1
      %p96 = scmp.eq.s32.totalorder %s11, 3
      %p97 = scmp.ne.s32.totalorder %s92, %s94
      %p98 = scmp.eq.s32.totalorder %s11, 0
      %p99 = por %p97, %p98
      %p100 = scmp.ne.s32.totalorder %s92, %s94
      %p101 = scmp.eq.s32.totalorder %s16, 3
      %p102 = por %p100, %p101
      %p103 = scmp.ne.s32.totalorder %s94, %s95
      %p104 = scmp.eq.s32.totalorder %s16, 0
      %p105 = por %p103, %p104
      %p106 = scmp.ne.s32.totalorder %s94, %s95
      %p107 = scmp.eq.s32.totalorder %s17, 3
      %p108 = por %p106, %p107
      %p110 = scmp.ne.s32.totalorder %s95, %s109
      %p111 = scmp.eq.s32.totalorder %s17, 0
      %p112 = por %p110, %p111
      %s113 = ssub.s32 %s11, %s18
      %p114 = scmp.eq.s32.totalorder %s113, 0
      %s116 = sadd.s32 %s115, 1
      %s117 = scalar_select %p114, %s115, %s116
      %p120 = pneg %p114
      %p121 = scmp.eq.s32.totalorder %s11, 3
      %p122 = por %p120, %p121
      %p123 = scmp.ne.s32.totalorder %s115, %s118
      %p124 = scmp.eq.s32.totalorder %s11, 0
      %p125 = por %p123, %p124
      %p126 = scmp.ne.s32.totalorder %s115, %s118
      %p127 = scmp.eq.s32.totalorder %s16, 3
      %p128 = por %p126, %p127
      %p129 = scmp.ne.s32.totalorder %s118, %s119
      %p130 = scmp.eq.s32.totalorder %s16, 0
      %p131 = por %p129, %p130
      %p132 = scmp.ne.s32.totalorder %s118, %s119
      %p133 = scmp.eq.s32.totalorder %s17, 3
      %p134 = por %p132, %p133
      %p136 = scmp.ne.s32.totalorder %s119, %s135
      %p137 = scmp.eq.s32.totalorder %s17, 0
      %p138 = por %p136, %p137
      %p139 = scmp.le.s32.totalorder 1, %s11
      %p140 = scmp.lt.s32.totalorder %s11, 5
      %p141 = pnand %p139, %p140
      %p142 = pneg %p141
      // Predicated region
      $region9: #{vencoder_forward_batched.1} parent=5 // pred_check
        _
      $region10: #{vencoder_forward_batched.1} parent=5 // pred_check_branch
        %144 = sbr.rel (%p141) target = $region12
      $region11: #{vencoder_forward_batched.1} parent=5 // pred_region
        %s145 = ssub.s32 %s11, 1
        // Predicated region
        $region13: #{vencoder_forward_batched.1} parent=11 // pred_check
          %p146 = pneg %p84
        $region14: #{vencoder_forward_batched.1} parent=11 // pred_check_branch
          %148 = sbr.rel (%p146) target = $region16
        $region15: #{vencoder_forward_batched.1} parent=11 // pred_region
          _
        $region16: #{vencoder_forward_batched.1} parent=11 // pred_fallthru
          _
        // Predicated region
        $region17: #{vencoder_forward_batched.1} parent=11 // pred_check
          %p149 = pneg %p105
        $region18: #{vencoder_forward_batched.1} parent=11 // pred_check_branch
          %151 = sbr.rel (%p149) target = $region20
        $region19: #{vencoder_forward_batched.1} parent=11 // pred_region
          %153 = vsyncadd [#allocation3], 0
          %s154 = sshll.u32 %s3, 4
          %s155 = int_to_ptr.hbm [resolvable:$true] %s154
          %s156 = sshll.u32 [#allocation2], 4
          %s157 = int_to_ptr.vmem [resolvable:$true] %s156
          %162 = dma.hbm_to_vmem [thread:$0]  %s155, 3072, %s157, [#allocation3], 192, 192, 12
        $region20: #{vencoder_forward_batched.1} parent=11 // pred_fallthru
          _
      $region12: #{vencoder_forward_batched.1} parent=5 // pred_fallthru
        _
      %p163 = scmp.lt.s32.totalorder %s11, 4
      // Predicated region
      $region21: #{vencoder_forward_batched.1} parent=5 // pred_check
        %p164 = pneg %p163
      $region22: #{vencoder_forward_batched.1} parent=5 // pred_check_branch
        %166 = sbr.rel (%p164) target = $region24
      $region23: #{vencoder_forward_batched.1} parent=5 // pred_region
        // Predicated region
        $region25: #{vencoder_forward_batched.1} parent=23 // pred_check
          %p167 = pneg %p31
        $region26: #{vencoder_forward_batched.1} parent=23 // pred_check_branch
          %169 = sbr.rel (%p167) target = $region28
        $region27: #{vencoder_forward_batched.1} parent=23 // pred_region
          %p170 = scmp.lt.s32.totalorder %s11, 3
          %s171 = scalar_select %p170, %s11, 3
          %s172 = smul.addr %s171, 8
          %s173 = smul.addr %s172, 8
          %s174 = scalar_lea.vmem %s0, %s173
        $region28: #{vencoder_forward_batched.1} parent=23 // pred_fallthru
          _
        // Predicated region
        $region29: #{vencoder_forward_batched.1} parent=23 // pred_check
          %p175 = pneg %p57
        $region30: #{vencoder_forward_batched.1} parent=23 // pred_check_branch
          %177 = sbr.rel (%p175) target = $region32
        $region31: #{vencoder_forward_batched.1} parent=23 // pred_region
          %p178 = scmp.lt.s32.totalorder %s11, 3
          %s179 = scalar_select %p178, %s11, 3
          %s180 = smul.addr %s179, 8
          %s181 = smul.addr %s180, 8
          %s182 = scalar_lea.vmem %s1, %s181
        $region32: #{vencoder_forward_batched.1} parent=23 // pred_fallthru
          _
      $region24: #{vencoder_forward_batched.1} parent=5 // pred_fallthru
        _
      %p183 = scmp.le.s32.totalorder 1, %s11
      %p184 = scmp.lt.s32.totalorder %s11, 5
      %p185 = pnand %p183, %p184
      %p186 = pneg %p185
      // Predicated region
      $region33: #{vencoder_forward_batched.1} parent=5 // pred_check
        _
      $region34: #{vencoder_forward_batched.1} parent=5 // pred_check_branch
        %188 = sbr.rel (%p185) target = $region36
      $region35: #{vencoder_forward_batched.1} parent=5 // pred_region
        %s189 = ssub.s32 %s11, 1
        // Predicated region
        $region37: #{vencoder_forward_batched.1} parent=35 // pred_check
          %p190 = pneg %p105
        $region38: #{vencoder_forward_batched.1} parent=35 // pred_check_branch
          %192 = sbr.rel (%p190) target = $region40
        $region39: #{vencoder_forward_batched.1} parent=35 // pred_region
          %194 = dma.done [#allocation3], 3072
        $region40: #{vencoder_forward_batched.1} parent=35 // pred_fallthru
          _
        %p195 = scmp.lt.s32.totalorder %s16, 3
        %s196 = scalar_select %p195, %s16, 3
        %s197 = smul.addr %s196, 8
        %s198 = smul.addr %s197, 8
        %s199 = scalar_lea.vmem %s0, %s198
        %p200 = pneg %p37
        %p201 = pneg %p34
        %p202 = scmp.lt.s32.totalorder %s16, 3
        %s203 = scalar_select %p202, %s16, 3
        %s204 = smul.addr %s203, 8
        %s205 = smul.addr %s204, 8
        %s206 = scalar_lea.vmem %s1, %s205
        %p207 = pneg %p63
        %p208 = pneg %p60
        %p209 = pneg %p84
        %p210 = pneg %p81
        %p211 = pneg %p105
        %p212 = pneg %p102
        %p213 = pneg %p131
        %p214 = pneg %p128
        %p215 = scmp.lt.s32.totalorder %s16, 3
        %s216 = scalar_select %p215, %s16, 3
        %s217 = smul.addr %s216, 24
        %s218 = smul.addr %s217, 8
        %s219 = scalar_lea.vmem %s4, %s218
        %p220 = scmp.lt.s32.totalorder %s16, 3
        %s221 = scalar_select %p220, %s16, 3
        %s222 = smul.addr %s221, 8
        %s223 = smul.addr %s222, 8
        %s224 = scalar_lea.vmem %s0, %s223
        %p225 = scmp.lt.s32.totalorder %s16, 3
        %s226 = scalar_select %p225, %s16, 3
        %s227 = smul.addr %s226, 8
        %s228 = smul.addr %s227, 8
        %s229 = scalar_lea.vmem %s1, %s228
        %p230 = scmp.lt.s32.totalorder %s16, 3
        %s231 = scalar_select %p230, %s16, 3
        %s232 = smul.addr %s231, 24
        %s233 = smul.addr %s232, 8
        %s234 = scalar_lea.vmem %s4, %s233
        %v236 = vld [vmem:[%s229] sm:$0xff]
        %v237 = vld [vmem:[%s229 + $0x8] sm:$0xff]
        %v238 = vld [vmem:[%s229 + $0x10] sm:$0xff]
        %v239 = vld [vmem:[%s229 + $0x18] sm:$0xff]
        %v240 = vld [vmem:[%s229 + $0x20] sm:$0xff]
        %v241 = vld [vmem:[%s229 + $0x28] sm:$0xff]
        %v242 = vld [vmem:[%s229 + $0x30] sm:$0xff]
        %v243 = vld [vmem:[%s229 + $0x38] sm:$0xff]
        %v244 = vpack.c.bf16 %v237, %v236
        %v245 = vpack.c.bf16 %v239, %v238
        %v246 = vpack.c.bf16 %v241, %v240
        %v247 = vpack.c.bf16 %v243, %v242
        %v248 = vld [vmem:[%s224] sm:$0xff]
        %v249 = vld [vmem:[%s224 + $0x8] sm:$0xff]
        %v250 = vld [vmem:[%s224 + $0x10] sm:$0xff]
        %v251 = vld [vmem:[%s224 + $0x18] sm:$0xff]
        %v252 = vld [vmem:[%s224 + $0x20] sm:$0xff]
        %v253 = vld [vmem:[%s224 + $0x28] sm:$0xff]
        %v254 = vld [vmem:[%s224 + $0x30] sm:$0xff]
        %v255 = vld [vmem:[%s224 + $0x38] sm:$0xff]
        %v256 = vpack.c.bf16 %v249, %v248
        %v257 = vpack.c.bf16 %v251, %v250
        %v258 = vpack.c.bf16 %v253, %v252
        %v259 = vpack.c.bf16 %v255, %v254
        %vm260 = vcmask 523264
        %v262 = vsel %vm260, %v244, 0
        %v265 = vsel %vm260, %v245, 0
        %v268 = vsel %vm260, %v246, 0
        %v271 = vsel %vm260, %v247, 0
        %273 = vmatpush.bf16.msra.mxu0 0
        %274 = vmatpush.bf16.msra.mxu0 0
        %275 = vmatpush.bf16.msra.mxu0 0
        %276 = vmatpush.bf16.msra.mxu0 0
        %277 = vmatpush.bf16.msra.mxu0 %v259
        %278 = vmatpush.bf16.msra.mxu0 %v258
        %279 = vmatpush.bf16.msra.mxu0 %v257
        %280 = vmatpush.bf16.msra.mxu0 %v256
        %281 = vmatmul.bf16.gmra.mxu0 %v262
        %v282 = vpop.f32.mrf.mxu0
        %v283 = vadd.f32 0.0, %v282
        %v284 = vpop.f32.mrf.mxu0
        %v285 = vadd.f32 0.0, %v284
        %286 = vmatmul.bf16.gmra.mxu0 %v265
        %v287 = vpop.f32.mrf.mxu0
        %v288 = vadd.f32 0.0, %v287
        %v289 = vpop.f32.mrf.mxu0
        %v290 = vadd.f32 0.0, %v289
        %291 = vmatmul.bf16.gmra.mxu0 %v268
        %v292 = vpop.f32.mrf.mxu0
        %v293 = vadd.f32 0.0, %v292
        %v294 = vpop.f32.mrf.mxu0
        %v295 = vadd.f32 0.0, %v294
        %296 = vmatmul.bf16.gmra.mxu0 %v271
        %v297 = vpop.f32.mrf.mxu0
        %v298 = vadd.f32 0.0, %v297
        %v299 = vpop.f32.mrf.mxu0
        %v300 = vadd.f32 0.0, %v299
        %301 = vdwg.mxu0
        %v302 = vpack.c.bf16 %v285, %v283
        %v303 = vpack.c.bf16 %v290, %v288
        %v304 = vpack.c.bf16 %v295, %v293
        %v305 = vpack.c.bf16 %v300, %v298
        %v306 = vld [vmem:[%s2] sm:$0xf]
        %v307 = vld [vmem:[%s2 + $0x4] sm:$0xf]
        %v308 = vld [vmem:[%s2 + $0x8] sm:$0xf]
        %v309 = vld [vmem:[%s2 + $0xc] sm:$0xf]
        %v310 = vld [vmem:[%s2 + $0x10] sm:$0xf]
        %v311 = vld [vmem:[%s2 + $0x14] sm:$0xf]
        %v312 = vld [vmem:[%s2 + $0x18] sm:$0xf]
        %v313 = vld [vmem:[%s2 + $0x1c] sm:$0xf]
        %v314 = vld [vmem:[%s2 + $0x20] sm:$0xf]
        %v315 = vld [vmem:[%s2 + $0x24] sm:$0xf]
        %v316 = vld [vmem:[%s2 + $0x28] sm:$0xf]
        %v317 = vld [vmem:[%s2 + $0x2c] sm:$0xf]
        %v318 = vld [vmem:[%s2 + $0x30] sm:$0xf]
        %v319 = vld [vmem:[%s2 + $0x34] sm:$0xf]
        %v320 = vld [vmem:[%s2 + $0x38] sm:$0xf]
        %v321 = vld [vmem:[%s2 + $0x3c] sm:$0xf]
        %v338 = vunpack.c.l.b16 %v306
        %v339 = vunpack.c.l.b16 %v307
        %v340 = vunpack.c.l.b16 %v308
        %v341 = vunpack.c.l.b16 %v309
        %v342 = vunpack.c.l.b16 %v310
        %v343 = vunpack.c.l.b16 %v311
        %v344 = vunpack.c.l.b16 %v312
        %v345 = vunpack.c.l.b16 %v313
        %v346 = vunpack.c.l.b16 %v314
        %v347 = vunpack.c.l.b16 %v315
        %v348 = vunpack.c.l.b16 %v316
        %v349 = vunpack.c.l.b16 %v317
        %v350 = vunpack.c.l.b16 %v318
        %v351 = vunpack.c.l.b16 %v319
        %v352 = vunpack.c.l.b16 %v320
        %v353 = vunpack.c.l.b16 %v321
        %v354 = vpack.c.b16 %v339, %v338
        %v355 = vpack.c.b16 %v341, %v340
        %v356 = vpack.c.b16 %v343, %v342
        %v357 = vpack.c.b16 %v345, %v344
        %v358 = vpack.c.b16 %v347, %v346
        %v359 = vpack.c.b16 %v349, %v348
        %v360 = vpack.c.b16 %v351, %v350
        %v361 = vpack.c.b16 %v353, %v352
        %370 = vmatpush.bf16.msra.mxu0 %v361
        %371 = vmatpush.bf16.msra.mxu0 %v360
        %372 = vmatpush.bf16.msra.mxu0 %v359
        %373 = vmatpush.bf16.msra.mxu0 %v358
        %374 = vmatpush.bf16.msra.mxu0 %v357
        %375 = vmatpush.bf16.msra.mxu0 %v356
        %376 = vmatpush.bf16.msra.mxu0 %v355
        %377 = vmatpush.bf16.msra.mxu0 %v354
        %378 = vmatmul.bf16.gmra.mxu0 %v302
        %v379 = vpop.f32.mrf.mxu0
        %v380 = vadd.f32 0.0, %v379
        %v381 = vpop.f32.mrf.mxu0
        %v382 = vadd.f32 0.0, %v381
        %383 = vmatmul.bf16.gmra.mxu0 %v303
        %v384 = vpop.f32.mrf.mxu0
        %v385 = vadd.f32 0.0, %v384
        %v386 = vpop.f32.mrf.mxu0
        %v387 = vadd.f32 0.0, %v386
        %388 = vmatmul.bf16.gmra.mxu0 %v304
        %v389 = vpop.f32.mrf.mxu0
        %v390 = vadd.f32 0.0, %v389
        %v391 = vpop.f32.mrf.mxu0
        %v392 = vadd.f32 0.0, %v391
        %393 = vmatmul.bf16.gmra.mxu0 %v305
        %v394 = vpop.f32.mrf.mxu0
        %v395 = vadd.f32 0.0, %v394
        %v396 = vpop.f32.mrf.mxu0
        %v397 = vadd.f32 0.0, %v396
        %398 = vdwg.mxu0
        %v399 = vadd.f32 %v380, %v382
        %v400 = vadd.f32 %v399, %v385
        %v401 = vadd.f32 %v400, %v387
        %v402 = vadd.f32 %v401, %v390
        %v403 = vadd.f32 %v402, %v392
        %v404 = vadd.f32 %v403, %v395
        %v405 = vadd.f32 %v404, %v397
        %v406 = vrot.slane %v405, 4
        %v407 = vadd.f32 %v405, %v406
        %v408 = vrot.slane %v407, 2
        %v409 = vadd.f32 %v407, %v408
        %v410 = vrot.slane %v409, 1
        %v411 = vadd.f32 %v409, %v410
        %v412 = vmul.f32 %v380, %v380
        %v413 = vmul.f32 %v382, %v382
        %v414 = vmul.f32 %v385, %v385
        %v415 = vmul.f32 %v387, %v387
        %v416 = vmul.f32 %v390, %v390
        %v417 = vmul.f32 %v392, %v392
        %v418 = vmul.f32 %v395, %v395
        %v419 = vmul.f32 %v397, %v397
        %v420 = vadd.f32 %v412, %v413
        %v421 = vadd.f32 %v420, %v414
        %v422 = vadd.f32 %v421, %v415
        %v423 = vadd.f32 %v422, %v416
        %v424 = vadd.f32 %v423, %v417
        %v425 = vadd.f32 %v424, %v418
        %v426 = vadd.f32 %v425, %v419
        %v427 = vrot.slane %v426, 4
        %v428 = vadd.f32 %v426, %v427
        %v429 = vrot.slane %v428, 2
        %v430 = vadd.f32 %v428, %v429
        %v431 = vrot.slane %v430, 1
        %v432 = vadd.f32 %v430, %v431
        %v433 = vmul.f32 %v411, 0.015625
        %v434 = vmul.f32 %v432, 0.015625
        %v435 = vmul.f32 %v433, %v433
        %v436 = vsub.f32 %v434, %v435
        %v437 = vmax.f32 %v436, 0.0
        %v438 = vsub.f32 %v380, %v433
        %v439 = vsub.f32 %v382, %v433
        %v440 = vsub.f32 %v385, %v433
        %v441 = vsub.f32 %v387, %v433
        %v442 = vsub.f32 %v390, %v433
        %v443 = vsub.f32 %v392, %v433
        %v444 = vsub.f32 %v395, %v433
        %v445 = vsub.f32 %v397, %v433
        %v446 = vadd.f32 %v437, 1e-05
        %v447 = vrsqrt.pop %v446
        %v448 = vmul.f32 %v447, %v446
        %v449 = vmul.f32 %v448, %v447
        %v450 = vmul.f32 0.5, %v449
        %v451 = vsub.f32 1.5, %v450
        %v452 = vmul.f32 %v447, %v451
        %vm453 = vweird.f32 %v446
        %vm454 = vweird.f32 %v447
        %vm455 = vmor %vm453, %vm454
        %v456 = vsel %vm455, %v447, %v452
        %v457 = vmul.f32 %v438, %v456
        %v458 = vmul.f32 %v439, %v456
        %v459 = vmul.f32 %v440, %v456
        %v460 = vmul.f32 %v441, %v456
        %v461 = vmul.f32 %v442, %v456
        %v462 = vmul.f32 %v443, %v456
        %v463 = vmul.f32 %v444, %v456
        %v464 = vmul.f32 %v445, %v456
        %v465 = vmax.f32 %v457, 0.0
        %v466 = vmax.f32 %v458, 0.0
        %v467 = vmax.f32 %v459, 0.0
        %v468 = vmax.f32 %v460, 0.0
        %v469 = vmax.f32 %v461, 0.0
        %v470 = vmax.f32 %v462, 0.0
        %v471 = vmax.f32 %v463, 0.0
        %v472 = vmax.f32 %v464, 0.0
        %v473 = vpack.c.bf16 %v466, %v465
        %v474 = vpack.c.bf16 %v468, %v467
        %v475 = vpack.c.bf16 %v470, %v469
        %v476 = vpack.c.bf16 %v472, %v471
        %477 = vmatpush.bf16.msra.mxu0 0
        %478 = vmatpush.bf16.msra.mxu0 0
        %479 = vmatpush.bf16.msra.mxu0 0
        %480 = vmatpush.bf16.msra.mxu0 0
        %481 = vmatpush.bf16.msra.mxu0 %v476
        %482 = vmatpush.bf16.msra.mxu0 %v475
        %483 = vmatpush.bf16.msra.mxu0 %v474
        %484 = vmatpush.bf16.msra.mxu0 %v473
        %485 = vmatmul.bf16.gmra.mxu0 %v262
        %v486 = vpop.f32.mrf.mxu0
        %v487 = vadd.f32 0.0, %v486
        %v488 = vpop.f32.mrf.mxu0
        %v489 = vadd.f32 0.0, %v488
        %490 = vmatmul.bf16.gmra.mxu0 %v265
        %v491 = vpop.f32.mrf.mxu0
        %v492 = vadd.f32 0.0, %v491
        %v493 = vpop.f32.mrf.mxu0
        %v494 = vadd.f32 0.0, %v493
        %495 = vmatmul.bf16.gmra.mxu0 %v268
        %v496 = vpop.f32.mrf.mxu0
        %v497 = vadd.f32 0.0, %v496
        %v498 = vpop.f32.mrf.mxu0
        %v499 = vadd.f32 0.0, %v498
        %500 = vmatmul.bf16.gmra.mxu0 %v271
        %v501 = vpop.f32.mrf.mxu0
        %v502 = vadd.f32 0.0, %v501
        %v503 = vpop.f32.mrf.mxu0
        %v504 = vadd.f32 0.0, %v503
        %505 = vdwg.mxu0
        %v506 = vpack.c.bf16 %v489, %v487
        %v507 = vpack.c.bf16 %v494, %v492
        %v508 = vpack.c.bf16 %v499, %v497
        %v509 = vpack.c.bf16 %v504, %v502
        %s510 = scalar_lea.vmem %s2, 64
        %v511 = vld [vmem:[%s510] sm:$0xf]
        %v512 = vld [vmem:[%s510 + $0x4] sm:$0xf]
        %v513 = vld [vmem:[%s510 + $0x8] sm:$0xf]
        %v514 = vld [vmem:[%s510 + $0xc] sm:$0xf]
        %v515 = vld [vmem:[%s510 + $0x10] sm:$0xf]
        %v516 = vld [vmem:[%s510 + $0x14] sm:$0xf]
        %v517 = vld [vmem:[%s510 + $0x18] sm:$0xf]
        %v518 = vld [vmem:[%s510 + $0x1c] sm:$0xf]
        %v519 = vld [vmem:[%s510 + $0x20] sm:$0xf]
        %v520 = vld [vmem:[%s510 + $0x24] sm:$0xf]
        %v521 = vld [vmem:[%s510 + $0x28] sm:$0xf]
        %v522 = vld [vmem:[%s510 + $0x2c] sm:$0xf]
        %v523 = vld [vmem:[%s510 + $0x30] sm:$0xf]
        %v524 = vld [vmem:[%s510 + $0x34] sm:$0xf]
        %v525 = vld [vmem:[%s510 + $0x38] sm:$0xf]
        %v526 = vld [vmem:[%s510 + $0x3c] sm:$0xf]
        %v543 = vunpack.c.l.b16 %v511
        %v544 = vunpack.c.l.b16 %v512
        %v545 = vunpack.c.l.b16 %v513
        %v546 = vunpack.c.l.b16 %v514
        %v547 = vunpack.c.l.b16 %v515
        %v548 = vunpack.c.l.b16 %v516
        %v549 = vunpack.c.l.b16 %v517
        %v550 = vunpack.c.l.b16 %v518
        %v551 = vunpack.c.l.b16 %v519
        %v552 = vunpack.c.l.b16 %v520
        %v553 = vunpack.c.l.b16 %v521
        %v554 = vunpack.c.l.b16 %v522
        %v555 = vunpack.c.l.b16 %v523
        %v556 = vunpack.c.l.b16 %v524
        %v557 = vunpack.c.l.b16 %v525
        %v558 = vunpack.c.l.b16 %v526
        %v559 = vpack.c.b16 %v544, %v543
        %v560 = vpack.c.b16 %v546, %v545
        %v561 = vpack.c.b16 %v548, %v547
        %v562 = vpack.c.b16 %v550, %v549
        %v563 = vpack.c.b16 %v552, %v551
        %v564 = vpack.c.b16 %v554, %v553
        %v565 = vpack.c.b16 %v556, %v555
        %v566 = vpack.c.b16 %v558, %v557
        %575 = vmatpush.bf16.msra.mxu0 %v566
        %576 = vmatpush.bf16.msra.mxu0 %v565
        %577 = vmatpush.bf16.msra.mxu0 %v564
        %578 = vmatpush.bf16.msra.mxu0 %v563
        %579 = vmatpush.bf16.msra.mxu0 %v562
        %580 = vmatpush.bf16.msra.mxu0 %v561
        %581 = vmatpush.bf16.msra.mxu0 %v560
        %582 = vmatpush.bf16.msra.mxu0 %v559
        %583 = vmatmul.bf16.gmra.mxu0 %v506
        %v584 = vpop.f32.mrf.mxu0
        %v585 = vadd.f32 0.0, %v584
        %v586 = vpop.f32.mrf.mxu0
        %v587 = vadd.f32 0.0, %v586
        %588 = vmatmul.bf16.gmra.mxu0 %v507
        %v589 = vpop.f32.mrf.mxu0
        %v590 = vadd.f32 0.0, %v589
        %v591 = vpop.f32.mrf.mxu0
        %v592 = vadd.f32 0.0, %v591
        %593 = vmatmul.bf16.gmra.mxu0 %v508
        %v594 = vpop.f32.mrf.mxu0
        %v595 = vadd.f32 0.0, %v594
        %v596 = vpop.f32.mrf.mxu0
        %v597 = vadd.f32 0.0, %v596
        %598 = vmatmul.bf16.gmra.mxu0 %v509
        %v599 = vpop.f32.mrf.mxu0
        %v600 = vadd.f32 0.0, %v599
        %v601 = vpop.f32.mrf.mxu0
        %v602 = vadd.f32 0.0, %v601
        %603 = vdwg.mxu0
        %v604 = vadd.f32 %v585, %v587
        %v605 = vadd.f32 %v604, %v590
        %v606 = vadd.f32 %v605, %v592
        %v607 = vadd.f32 %v606, %v595
        %v608 = vadd.f32 %v607, %v597
        %v609 = vadd.f32 %v608, %v600
        %v610 = vadd.f32 %v609, %v602
        %v611 = vrot.slane %v610, 4
        %v612 = vadd.f32 %v610, %v611
        %v613 = vrot.slane %v612, 2
        %v614 = vadd.f32 %v612, %v613
        %v615 = vrot.slane %v614, 1
        %v616 = vadd.f32 %v614, %v615
        %v617 = vmul.f32 %v585, %v585
        %v618 = vmul.f32 %v587, %v587
        %v619 = vmul.f32 %v590, %v590
        %v620 = vmul.f32 %v592, %v592
        %v621 = vmul.f32 %v595, %v595
        %v622 = vmul.f32 %v597, %v597
        %v623 = vmul.f32 %v600, %v600
        %v624 = vmul.f32 %v602, %v602
        %v625 = vadd.f32 %v617, %v618
        %v626 = vadd.f32 %v625, %v619
        %v627 = vadd.f32 %v626, %v620
        %v628 = vadd.f32 %v627, %v621
        %v629 = vadd.f32 %v628, %v622
        %v630 = vadd.f32 %v629, %v623
        %v631 = vadd.f32 %v630, %v624
        %v632 = vrot.slane %v631, 4
        %v633 = vadd.f32 %v631, %v632
        %v634 = vrot.slane %v633, 2
        %v635 = vadd.f32 %v633, %v634
        %v636 = vrot.slane %v635, 1
        %v637 = vadd.f32 %v635, %v636
        %v638 = vmul.f32 %v616, 0.015625
        %v639 = vmul.f32 %v637, 0.015625
        %v640 = vmul.f32 %v638, %v638
        %v641 = vsub.f32 %v639, %v640
        %v642 = vmax.f32 %v641, 0.0
        %v643 = vsub.f32 %v585, %v638
        %v644 = vsub.f32 %v587, %v638
        %v645 = vsub.f32 %v590, %v638
        %v646 = vsub.f32 %v592, %v638
        %v647 = vsub.f32 %v595, %v638
        %v648 = vsub.f32 %v597, %v638
        %v649 = vsub.f32 %v600, %v638
        %v650 = vsub.f32 %v602, %v638
        %v651 = vadd.f32 %v642, 1e-05
        %v652 = vrsqrt.pop %v651
        %v653 = vmul.f32 %v652, %v651
        %v654 = vmul.f32 %v653, %v652
        %v655 = vmul.f32 0.5, %v654
        %v656 = vsub.f32 1.5, %v655
        %v657 = vmul.f32 %v652, %v656
        %vm658 = vweird.f32 %v651
        %vm659 = vweird.f32 %v652
        %vm660 = vmor %vm658, %vm659
        %v661 = vsel %vm660, %v652, %v657
        %v662 = vmul.f32 %v643, %v661
        %v663 = vmul.f32 %v644, %v661
        %v664 = vmul.f32 %v645, %v661
        %v665 = vmul.f32 %v646, %v661
        %v666 = vmul.f32 %v647, %v661
        %v667 = vmul.f32 %v648, %v661
        %v668 = vmul.f32 %v649, %v661
        %v669 = vmul.f32 %v650, %v661
        %v670 = vmax.f32 %v662, 0.0
        %v671 = vmax.f32 %v663, 0.0
        %v672 = vmax.f32 %v664, 0.0
        %v673 = vmax.f32 %v665, 0.0
        %v674 = vmax.f32 %v666, 0.0
        %v675 = vmax.f32 %v667, 0.0
        %v676 = vmax.f32 %v668, 0.0
        %v677 = vmax.f32 %v669, 0.0
        %v678 = vpack.c.bf16 %v671, %v670
        %v679 = vpack.c.bf16 %v673, %v672
        %v680 = vpack.c.bf16 %v675, %v674
        %v681 = vpack.c.bf16 %v677, %v676
        %682 = vmatpush.bf16.msra.mxu0 0
        %683 = vmatpush.bf16.msra.mxu0 0
        %684 = vmatpush.bf16.msra.mxu0 0
        %685 = vmatpush.bf16.msra.mxu0 0
        %686 = vmatpush.bf16.msra.mxu0 %v681
        %687 = vmatpush.bf16.msra.mxu0 %v680
        %688 = vmatpush.bf16.msra.mxu0 %v679
        %689 = vmatpush.bf16.msra.mxu0 %v678
        %690 = vmatmul.bf16.gmra.mxu0 %v262
        %v691 = vpop.f32.mrf.mxu0
        %v692 = vadd.f32 0.0, %v691
        %v693 = vpop.f32.mrf.mxu0
        %v694 = vadd.f32 0.0, %v693
        %695 = vmatmul.bf16.gmra.mxu0 %v265
        %v696 = vpop.f32.mrf.mxu0
        %v697 = vadd.f32 0.0, %v696
        %v698 = vpop.f32.mrf.mxu0
        %v699 = vadd.f32 0.0, %v698
        %700 = vmatmul.bf16.gmra.mxu0 %v268
        %v701 = vpop.f32.mrf.mxu0
        %v702 = vadd.f32 0.0, %v701
        %v703 = vpop.f32.mrf.mxu0
        %v704 = vadd.f32 0.0, %v703
        %705 = vmatmul.bf16.gmra.mxu0 %v271
        %v706 = vpop.f32.mrf.mxu0
        %v707 = vadd.f32 0.0, %v706
        %v708 = vpop.f32.mrf.mxu0
        %v709 = vadd.f32 0.0, %v708
        %710 = vdwg.mxu0
        %v711 = vpack.c.bf16 %v694, %v692
        %v712 = vpack.c.bf16 %v699, %v697
        %v713 = vpack.c.bf16 %v704, %v702
        %v714 = vpack.c.bf16 %v709, %v707
        %s715 = scalar_lea.vmem %s2, 128
        %v716 = vld [vmem:[%s715] sm:$0xf]
        %v717 = vld [vmem:[%s715 + $0x4] sm:$0xf]
        %v718 = vld [vmem:[%s715 + $0x8] sm:$0xf]
        %v719 = vld [vmem:[%s715 + $0xc] sm:$0xf]
        %v720 = vld [vmem:[%s715 + $0x10] sm:$0xf]
        %v721 = vld [vmem:[%s715 + $0x14] sm:$0xf]
        %v722 = vld [vmem:[%s715 + $0x18] sm:$0xf]
        %v723 = vld [vmem:[%s715 + $0x1c] sm:$0xf]
        %v724 = vld [vmem:[%s715 + $0x20] sm:$0xf]
        %v725 = vld [vmem:[%s715 + $0x24] sm:$0xf]
        %v726 = vld [vmem:[%s715 + $0x28] sm:$0xf]
        %v727 = vld [vmem:[%s715 + $0x2c] sm:$0xf]
        %v728 = vld [vmem:[%s715 + $0x30] sm:$0xf]
        %v729 = vld [vmem:[%s715 + $0x34] sm:$0xf]
        %v730 = vld [vmem:[%s715 + $0x38] sm:$0xf]
        %v731 = vld [vmem:[%s715 + $0x3c] sm:$0xf]
        %v748 = vunpack.c.l.b16 %v716
        %v749 = vunpack.c.l.b16 %v717
        %v750 = vunpack.c.l.b16 %v718
        %v751 = vunpack.c.l.b16 %v719
        %v752 = vunpack.c.l.b16 %v720
        %v753 = vunpack.c.l.b16 %v721
        %v754 = vunpack.c.l.b16 %v722
        %v755 = vunpack.c.l.b16 %v723
        %v756 = vunpack.c.l.b16 %v724
        %v757 = vunpack.c.l.b16 %v725
        %v758 = vunpack.c.l.b16 %v726
        %v759 = vunpack.c.l.b16 %v727
        %v760 = vunpack.c.l.b16 %v728
        %v761 = vunpack.c.l.b16 %v729
        %v762 = vunpack.c.l.b16 %v730
        %v763 = vunpack.c.l.b16 %v731
        %v764 = vpack.c.b16 %v749, %v748
        %v765 = vpack.c.b16 %v751, %v750
        %v766 = vpack.c.b16 %v753, %v752
        %v767 = vpack.c.b16 %v755, %v754
        %v768 = vpack.c.b16 %v757, %v756
        %v769 = vpack.c.b16 %v759, %v758
        %v770 = vpack.c.b16 %v761, %v760
        %v771 = vpack.c.b16 %v763, %v762
        %780 = vmatpush.bf16.msra.mxu0 %v771
        %781 = vmatpush.bf16.msra.mxu0 %v770
        %782 = vmatpush.bf16.msra.mxu0 %v769
        %783 = vmatpush.bf16.msra.mxu0 %v768
        %784 = vmatpush.bf16.msra.mxu0 %v767
        %785 = vmatpush.bf16.msra.mxu0 %v766
        %786 = vmatpush.bf16.msra.mxu0 %v765
        %787 = vmatpush.bf16.msra.mxu0 %v764
        %788 = vmatmul.bf16.gmra.mxu0 %v711
        %v789 = vpop.f32.mrf.mxu0
        %v790 = vadd.f32 0.0, %v789
        %v791 = vpop.f32.mrf.mxu0
        %v792 = vadd.f32 0.0, %v791
        %793 = vmatmul.bf16.gmra.mxu0 %v712
        %v794 = vpop.f32.mrf.mxu0
        %v795 = vadd.f32 0.0, %v794
        %v796 = vpop.f32.mrf.mxu0
        %v797 = vadd.f32 0.0, %v796
        %798 = vmatmul.bf16.gmra.mxu0 %v713
        %v799 = vpop.f32.mrf.mxu0
        %v800 = vadd.f32 0.0, %v799
        %v801 = vpop.f32.mrf.mxu0
        %v802 = vadd.f32 0.0, %v801
        %803 = vmatmul.bf16.gmra.mxu0 %v714
        %v804 = vpop.f32.mrf.mxu0
        %v805 = vadd.f32 0.0, %v804
        %v806 = vpop.f32.mrf.mxu0
        %v807 = vadd.f32 0.0, %v806
        %808 = vdwg.mxu0
        %v809 = vadd.f32 %v790, %v792
        %v810 = vadd.f32 %v809, %v795
        %v811 = vadd.f32 %v810, %v797
        %v812 = vadd.f32 %v811, %v800
        %v813 = vadd.f32 %v812, %v802
        %v814 = vadd.f32 %v813, %v805
        %v815 = vadd.f32 %v814, %v807
        %v816 = vrot.slane %v815, 4
        %v817 = vadd.f32 %v815, %v816
        %v818 = vrot.slane %v817, 2
        %v819 = vadd.f32 %v817, %v818
        %v820 = vrot.slane %v819, 1
        %v821 = vadd.f32 %v819, %v820
        %v822 = vmul.f32 %v790, %v790
        %v823 = vmul.f32 %v792, %v792
        %v824 = vmul.f32 %v795, %v795
        %v825 = vmul.f32 %v797, %v797
        %v826 = vmul.f32 %v800, %v800
        %v827 = vmul.f32 %v802, %v802
        %v828 = vmul.f32 %v805, %v805
        %v829 = vmul.f32 %v807, %v807
        %v830 = vadd.f32 %v822, %v823
        %v831 = vadd.f32 %v830, %v824
        %v832 = vadd.f32 %v831, %v825
        %v833 = vadd.f32 %v832, %v826
        %v834 = vadd.f32 %v833, %v827
        %v835 = vadd.f32 %v834, %v828
        %v836 = vadd.f32 %v835, %v829
        %v837 = vrot.slane %v836, 4
        %v838 = vadd.f32 %v836, %v837
        %v839 = vrot.slane %v838, 2
        %v840 = vadd.f32 %v838, %v839
        %v841 = vrot.slane %v840, 1
        %v842 = vadd.f32 %v840, %v841
        %v843 = vmul.f32 %v821, 0.015625
        %v844 = vmul.f32 %v842, 0.015625
        %v845 = vmul.f32 %v843, %v843
        %v846 = vsub.f32 %v844, %v845
        %v847 = vmax.f32 %v846, 0.0
        %v848 = vsub.f32 %v790, %v843
        %v849 = vsub.f32 %v792, %v843
        %v850 = vsub.f32 %v795, %v843
        %v851 = vsub.f32 %v797, %v843
        %v852 = vsub.f32 %v800, %v843
        %v853 = vsub.f32 %v802, %v843
        %v854 = vsub.f32 %v805, %v843
        %v855 = vsub.f32 %v807, %v843
        %v856 = vadd.f32 %v847, 1e-05
        %v857 = vrsqrt.pop %v856
        %v858 = vmul.f32 %v857, %v856
        %v859 = vmul.f32 %v858, %v857
        %v860 = vmul.f32 0.5, %v859
        %v861 = vsub.f32 1.5, %v860
        %v862 = vmul.f32 %v857, %v861
        %vm863 = vweird.f32 %v856
        %vm864 = vweird.f32 %v857
        %vm865 = vmor %vm863, %vm864
        %v866 = vsel %vm865, %v857, %v862
        %v867 = vmul.f32 %v848, %v866
        %v868 = vmul.f32 %v849, %v866
        %v869 = vmul.f32 %v850, %v866
        %v870 = vmul.f32 %v851, %v866
        %v871 = vmul.f32 %v852, %v866
        %v872 = vmul.f32 %v853, %v866
        %v873 = vmul.f32 %v854, %v866
        %v874 = vmul.f32 %v855, %v866
        %v875 = vmax.f32 %v867, 0.0
        %v876 = vmax.f32 %v868, 0.0
        %v877 = vmax.f32 %v869, 0.0
        %v878 = vmax.f32 %v870, 0.0
        %v879 = vmax.f32 %v871, 0.0
        %v880 = vmax.f32 %v872, 0.0
        %v881 = vmax.f32 %v873, 0.0
        %v882 = vmax.f32 %v874, 0.0
        %v883 = vpack.c.bf16 %v876, %v875
        %v884 = vpack.c.bf16 %v878, %v877
        %v885 = vpack.c.bf16 %v880, %v879
        %v886 = vpack.c.bf16 %v882, %v881
        %887 = vmatpush.bf16.msra.mxu0 0
        %888 = vmatpush.bf16.msra.mxu0 0
        %889 = vmatpush.bf16.msra.mxu0 0
        %890 = vmatpush.bf16.msra.mxu0 0
        %891 = vmatpush.bf16.msra.mxu0 %v886
        %892 = vmatpush.bf16.msra.mxu0 %v885
        %893 = vmatpush.bf16.msra.mxu0 %v884
        %894 = vmatpush.bf16.msra.mxu0 %v883
        %895 = vmatmul.bf16.gmra.mxu0 %v262
        %v896 = vpop.f32.mrf.mxu0
        %v897 = vadd.f32 0.0, %v896
        %v898 = vpop.f32.mrf.mxu0
        %v899 = vadd.f32 0.0, %v898
        %900 = vmatmul.bf16.gmra.mxu0 %v265
        %v901 = vpop.f32.mrf.mxu0
        %v902 = vadd.f32 0.0, %v901
        %v903 = vpop.f32.mrf.mxu0
        %v904 = vadd.f32 0.0, %v903
        %905 = vmatmul.bf16.gmra.mxu0 %v268
        %v906 = vpop.f32.mrf.mxu0
        %v907 = vadd.f32 0.0, %v906
        %v908 = vpop.f32.mrf.mxu0
        %v909 = vadd.f32 0.0, %v908
        %910 = vmatmul.bf16.gmra.mxu0 %v271
        %v911 = vpop.f32.mrf.mxu0
        %v912 = vadd.f32 0.0, %v911
        %v913 = vpop.f32.mrf.mxu0
        %v914 = vadd.f32 0.0, %v913
        %915 = vdwg.mxu0
        %v916 = vpack.c.bf16 %v899, %v897
        %v917 = vpack.c.bf16 %v904, %v902
        %v918 = vpack.c.bf16 %v909, %v907
        %v919 = vpack.c.bf16 %v914, %v912
        %s920 = scalar_lea.vmem %s2, 192
        %v921 = vld [vmem:[%s920] sm:$0xf]
        %v922 = vld [vmem:[%s920 + $0x4] sm:$0xf]
        %v923 = vld [vmem:[%s920 + $0x8] sm:$0xf]
        %v924 = vld [vmem:[%s920 + $0xc] sm:$0xf]
        %v925 = vld [vmem:[%s920 + $0x10] sm:$0xf]
        %v926 = vld [vmem:[%s920 + $0x14] sm:$0xf]
        %v927 = vld [vmem:[%s920 + $0x18] sm:$0xf]
        %v928 = vld [vmem:[%s920 + $0x1c] sm:$0xf]
        %v929 = vld [vmem:[%s920 + $0x20] sm:$0xf]
        %v930 = vld [vmem:[%s920 + $0x24] sm:$0xf]
        %v931 = vld [vmem:[%s920 + $0x28] sm:$0xf]
        %v932 = vld [vmem:[%s920 + $0x2c] sm:$0xf]
        %v933 = vld [vmem:[%s920 + $0x30] sm:$0xf]
        %v934 = vld [vmem:[%s920 + $0x34] sm:$0xf]
        %v935 = vld [vmem:[%s920 + $0x38] sm:$0xf]
        %v936 = vld [vmem:[%s920 + $0x3c] sm:$0xf]
        %v953 = vunpack.c.l.b16 %v921
        %v954 = vunpack.c.l.b16 %v922
        %v955 = vunpack.c.l.b16 %v923
        %v956 = vunpack.c.l.b16 %v924
        %v957 = vunpack.c.l.b16 %v925
        %v958 = vunpack.c.l.b16 %v926
        %v959 = vunpack.c.l.b16 %v927
        %v960 = vunpack.c.l.b16 %v928
        %v961 = vunpack.c.l.b16 %v929
        %v962 = vunpack.c.l.b16 %v930
        %v963 = vunpack.c.l.b16 %v931
        %v964 = vunpack.c.l.b16 %v932
        %v965 = vunpack.c.l.b16 %v933
        %v966 = vunpack.c.l.b16 %v934
        %v967 = vunpack.c.l.b16 %v935
        %v968 = vunpack.c.l.b16 %v936
        %v969 = vpack.c.b16 %v954, %v953
        %v970 = vpack.c.b16 %v956, %v955
        %v971 = vpack.c.b16 %v958, %v957
        %v972 = vpack.c.b16 %v960, %v959
        %v973 = vpack.c.b16 %v962, %v961
        %v974 = vpack.c.b16 %v964, %v963
        %v975 = vpack.c.b16 %v966, %v965
        %v976 = vpack.c.b16 %v968, %v967
        %985 = vmatpush.bf16.msra.mxu0 %v976
        %986 = vmatpush.bf16.msra.mxu0 %v975
        %987 = vmatpush.bf16.msra.mxu0 %v974
        %988 = vmatpush.bf16.msra.mxu0 %v973
        %989 = vmatpush.bf16.msra.mxu0 %v972
        %990 = vmatpush.bf16.msra.mxu0 %v971
        %991 = vmatpush.bf16.msra.mxu0 %v970
        %992 = vmatpush.bf16.msra.mxu0 %v969
        %993 = vmatmul.bf16.gmra.mxu0 %v916
        %v994 = vpop.f32.mrf.mxu0
        %v995 = vadd.f32 0.0, %v994
        %v996 = vpop.f32.mrf.mxu0
        %v997 = vadd.f32 0.0, %v996
        %998 = vmatmul.bf16.gmra.mxu0 %v917
        %v999 = vpop.f32.mrf.mxu0
        %v1000 = vadd.f32 0.0, %v999
        %v1001 = vpop.f32.mrf.mxu0
        %v1002 = vadd.f32 0.0, %v1001
        %1003 = vmatmul.bf16.gmra.mxu0 %v918
        %v1004 = vpop.f32.mrf.mxu0
        %v1005 = vadd.f32 0.0, %v1004
        %v1006 = vpop.f32.mrf.mxu0
        %v1007 = vadd.f32 0.0, %v1006
        %1008 = vmatmul.bf16.gmra.mxu0 %v919
        %v1009 = vpop.f32.mrf.mxu0
        %v1010 = vadd.f32 0.0, %v1009
        %v1011 = vpop.f32.mrf.mxu0
        %v1012 = vadd.f32 0.0, %v1011
        %1013 = vdwg.mxu0
        %v1014 = vadd.f32 %v995, %v997
        %v1015 = vadd.f32 %v1014, %v1000
        %v1016 = vadd.f32 %v1015, %v1002
        %v1017 = vadd.f32 %v1016, %v1005
        %v1018 = vadd.f32 %v1017, %v1007
        %v1019 = vadd.f32 %v1018, %v1010
        %v1020 = vadd.f32 %v1019, %v1012
        %v1021 = vrot.slane %v1020, 4
        %v1022 = vadd.f32 %v1020, %v1021
        %v1023 = vrot.slane %v1022, 2
        %v1024 = vadd.f32 %v1022, %v1023
        %v1025 = vrot.slane %v1024, 1
        %v1026 = vadd.f32 %v1024, %v1025
        %v1027 = vmul.f32 %v995, %v995
        %v1028 = vmul.f32 %v997, %v997
        %v1029 = vmul.f32 %v1000, %v1000
        %v1030 = vmul.f32 %v1002, %v1002
        %v1031 = vmul.f32 %v1005, %v1005
        %v1032 = vmul.f32 %v1007, %v1007
        %v1033 = vmul.f32 %v1010, %v1010
        %v1034 = vmul.f32 %v1012, %v1012
        %v1035 = vadd.f32 %v1027, %v1028
        %v1036 = vadd.f32 %v1035, %v1029
        %v1037 = vadd.f32 %v1036, %v1030
        %v1038 = vadd.f32 %v1037, %v1031
        %v1039 = vadd.f32 %v1038, %v1032
        %v1040 = vadd.f32 %v1039, %v1033
        %v1041 = vadd.f32 %v1040, %v1034
        %v1042 = vrot.slane %v1041, 4
        %v1043 = vadd.f32 %v1041, %v1042
        %v1044 = vrot.slane %v1043, 2
        %v1045 = vadd.f32 %v1043, %v1044
        %v1046 = vrot.slane %v1045, 1
        %v1047 = vadd.f32 %v1045, %v1046
        %v1048 = vmul.f32 %v1026, 0.015625
        %v1049 = vmul.f32 %v1047, 0.015625
        %v1050 = vmul.f32 %v1048, %v1048
        %v1051 = vsub.f32 %v1049, %v1050
        %v1052 = vmax.f32 %v1051, 0.0
        %v1053 = vsub.f32 %v995, %v1048
        %v1054 = vsub.f32 %v997, %v1048
        %v1055 = vsub.f32 %v1000, %v1048
        %v1056 = vsub.f32 %v1002, %v1048
        %v1057 = vsub.f32 %v1005, %v1048
        %v1058 = vsub.f32 %v1007, %v1048
        %v1059 = vsub.f32 %v1010, %v1048
        %v1060 = vsub.f32 %v1012, %v1048
        %v1061 = vadd.f32 %v1052, 1e-05
        %v1062 = vrsqrt.pop %v1061
        %v1063 = vmul.f32 %v1062, %v1061
        %v1064 = vmul.f32 %v1063, %v1062
        %v1065 = vmul.f32 0.5, %v1064
        %v1066 = vsub.f32 1.5, %v1065
        %v1067 = vmul.f32 %v1062, %v1066
        %vm1068 = vweird.f32 %v1061
        %vm1069 = vweird.f32 %v1062
        %vm1070 = vmor %vm1068, %vm1069
        %v1071 = vsel %vm1070, %v1062, %v1067
        %v1072 = vmul.f32 %v1053, %v1071
        %v1073 = vmul.f32 %v1054, %v1071
        %v1074 = vmul.f32 %v1055, %v1071
        %v1075 = vmul.f32 %v1056, %v1071
        %v1076 = vmul.f32 %v1057, %v1071
        %v1077 = vmul.f32 %v1058, %v1071
        %v1078 = vmul.f32 %v1059, %v1071
        %v1079 = vmul.f32 %v1060, %v1071
        %v1080 = vmax.f32 %v1072, 0.0
        %v1081 = vmax.f32 %v1073, 0.0
        %v1082 = vmax.f32 %v1074, 0.0
        %v1083 = vmax.f32 %v1075, 0.0
        %v1084 = vmax.f32 %v1076, 0.0
        %v1085 = vmax.f32 %v1077, 0.0
        %v1086 = vmax.f32 %v1078, 0.0
        %v1087 = vmax.f32 %v1079, 0.0
        %v1088 = vpack.c.bf16 %v1081, %v1080
        %v1089 = vpack.c.bf16 %v1083, %v1082
        %v1090 = vpack.c.bf16 %v1085, %v1084
        %v1091 = vpack.c.bf16 %v1087, %v1086
        %1092 = vmatpush.bf16.msra.mxu0 0
        %1093 = vmatpush.bf16.msra.mxu0 0
        %1094 = vmatpush.bf16.msra.mxu0 0
        %1095 = vmatpush.bf16.msra.mxu0 0
        %1096 = vmatpush.bf16.msra.mxu0 %v1091
        %1097 = vmatpush.bf16.msra.mxu0 %v1090
        %1098 = vmatpush.bf16.msra.mxu0 %v1089
        %1099 = vmatpush.bf16.msra.mxu0 %v1088
        %1100 = vmatmul.bf16.gmra.mxu0 %v262
        %v1101 = vpop.f32.mrf.mxu0
        %v1102 = vadd.f32 0.0, %v1101
        %v1103 = vpop.f32.mrf.mxu0
        %v1104 = vadd.f32 0.0, %v1103
        %1105 = vmatmul.bf16.gmra.mxu0 %v265
        %v1106 = vpop.f32.mrf.mxu0
        %v1107 = vadd.f32 0.0, %v1106
        %v1108 = vpop.f32.mrf.mxu0
        %v1109 = vadd.f32 0.0, %v1108
        %1110 = vmatmul.bf16.gmra.mxu0 %v268
        %v1111 = vpop.f32.mrf.mxu0
        %v1112 = vadd.f32 0.0, %v1111
        %v1113 = vpop.f32.mrf.mxu0
        %v1114 = vadd.f32 0.0, %v1113
        %1115 = vmatmul.bf16.gmra.mxu0 %v271
        %v1116 = vpop.f32.mrf.mxu0
        %v1117 = vadd.f32 0.0, %v1116
        %v1118 = vpop.f32.mrf.mxu0
        %v1119 = vadd.f32 0.0, %v1118
        %1120 = vdwg.mxu0
        %v1121 = vpack.c.bf16 %v1104, %v1102
        %v1122 = vpack.c.bf16 %v1109, %v1107
        %v1123 = vpack.c.bf16 %v1114, %v1112
        %v1124 = vpack.c.bf16 %v1119, %v1117
        %s1125 = scalar_lea.vmem %s2, 256
        %v1126 = vld [vmem:[%s1125] sm:$0xf]
        %v1127 = vld [vmem:[%s1125 + $0x4] sm:$0xf]
        %v1128 = vld [vmem:[%s1125 + $0x8] sm:$0xf]
        %v1129 = vld [vmem:[%s1125 + $0xc] sm:$0xf]
        %v1130 = vld [vmem:[%s1125 + $0x10] sm:$0xf]
        %v1131 = vld [vmem:[%s1125 + $0x14] sm:$0xf]
        %v1132 = vld [vmem:[%s1125 + $0x18] sm:$0xf]
        %v1133 = vld [vmem:[%s1125 + $0x1c] sm:$0xf]
        %v1134 = vld [vmem:[%s1125 + $0x20] sm:$0xf]
        %v1135 = vld [vmem:[%s1125 + $0x24] sm:$0xf]
        %v1136 = vld [vmem:[%s1125 + $0x28] sm:$0xf]
        %v1137 = vld [vmem:[%s1125 + $0x2c] sm:$0xf]
        %v1138 = vld [vmem:[%s1125 + $0x30] sm:$0xf]
        %v1139 = vld [vmem:[%s1125 + $0x34] sm:$0xf]
        %v1140 = vld [vmem:[%s1125 + $0x38] sm:$0xf]
        %v1141 = vld [vmem:[%s1125 + $0x3c] sm:$0xf]
        %v1158 = vunpack.c.l.b16 %v1126
        %v1159 = vunpack.c.l.b16 %v1127
        %v1160 = vunpack.c.l.b16 %v1128
        %v1161 = vunpack.c.l.b16 %v1129
        %v1162 = vunpack.c.l.b16 %v1130
        %v1163 = vunpack.c.l.b16 %v1131
        %v1164 = vunpack.c.l.b16 %v1132
        %v1165 = vunpack.c.l.b16 %v1133
        %v1166 = vunpack.c.l.b16 %v1134
        %v1167 = vunpack.c.l.b16 %v1135
        %v1168 = vunpack.c.l.b16 %v1136
        %v1169 = vunpack.c.l.b16 %v1137
        %v1170 = vunpack.c.l.b16 %v1138
        %v1171 = vunpack.c.l.b16 %v1139
        %v1172 = vunpack.c.l.b16 %v1140
        %v1173 = vunpack.c.l.b16 %v1141
        %v1174 = vpack.c.b16 %v1159, %v1158
        %v1175 = vpack.c.b16 %v1161, %v1160
        %v1176 = vpack.c.b16 %v1163, %v1162
        %v1177 = vpack.c.b16 %v1165, %v1164
        %v1178 = vpack.c.b16 %v1167, %v1166
        %v1179 = vpack.c.b16 %v1169, %v1168
        %v1180 = vpack.c.b16 %v1171, %v1170
        %v1181 = vpack.c.b16 %v1173, %v1172
        %1190 = vmatpush.bf16.msra.mxu0 %v1181
        %1191 = vmatpush.bf16.msra.mxu0 %v1180
        %1192 = vmatpush.bf16.msra.mxu0 %v1179
        %1193 = vmatpush.bf16.msra.mxu0 %v1178
        %1194 = vmatpush.bf16.msra.mxu0 %v1177
        %1195 = vmatpush.bf16.msra.mxu0 %v1176
        %1196 = vmatpush.bf16.msra.mxu0 %v1175
        %1197 = vmatpush.bf16.msra.mxu0 %v1174
        %1198 = vmatmul.bf16.gmra.mxu0 %v1121
        %v1199 = vpop.f32.mrf.mxu0
        %v1200 = vadd.f32 0.0, %v1199
        %v1201 = vpop.f32.mrf.mxu0
        %v1202 = vadd.f32 0.0, %v1201
        %1203 = vmatmul.bf16.gmra.mxu0 %v1122
        %v1204 = vpop.f32.mrf.mxu0
        %v1205 = vadd.f32 0.0, %v1204
        %v1206 = vpop.f32.mrf.mxu0
        %v1207 = vadd.f32 0.0, %v1206
        %1208 = vmatmul.bf16.gmra.mxu0 %v1123
        %v1209 = vpop.f32.mrf.mxu0
        %v1210 = vadd.f32 0.0, %v1209
        %v1211 = vpop.f32.mrf.mxu0
        %v1212 = vadd.f32 0.0, %v1211
        %1213 = vmatmul.bf16.gmra.mxu0 %v1124
        %v1214 = vpop.f32.mrf.mxu0
        %v1215 = vadd.f32 0.0, %v1214
        %v1216 = vpop.f32.mrf.mxu0
        %v1217 = vadd.f32 0.0, %v1216
        %1218 = vdwg.mxu0
        %v1219 = vadd.f32 %v1200, %v1202
        %v1220 = vadd.f32 %v1219, %v1205
        %v1221 = vadd.f32 %v1220, %v1207
        %v1222 = vadd.f32 %v1221, %v1210
        %v1223 = vadd.f32 %v1222, %v1212
        %v1224 = vadd.f32 %v1223, %v1215
        %v1225 = vadd.f32 %v1224, %v1217
        %v1226 = vrot.slane %v1225, 4
        %v1227 = vadd.f32 %v1225, %v1226
        %v1228 = vrot.slane %v1227, 2
        %v1229 = vadd.f32 %v1227, %v1228
        %v1230 = vrot.slane %v1229, 1
        %v1231 = vadd.f32 %v1229, %v1230
        %v1232 = vmul.f32 %v1200, %v1200
        %v1233 = vmul.f32 %v1202, %v1202
        %v1234 = vmul.f32 %v1205, %v1205
        %v1235 = vmul.f32 %v1207, %v1207
        %v1236 = vmul.f32 %v1210, %v1210
        %v1237 = vmul.f32 %v1212, %v1212
        %v1238 = vmul.f32 %v1215, %v1215
        %v1239 = vmul.f32 %v1217, %v1217
        %v1240 = vadd.f32 %v1232, %v1233
        %v1241 = vadd.f32 %v1240, %v1234
        %v1242 = vadd.f32 %v1241, %v1235
        %v1243 = vadd.f32 %v1242, %v1236
        %v1244 = vadd.f32 %v1243, %v1237
        %v1245 = vadd.f32 %v1244, %v1238
        %v1246 = vadd.f32 %v1245, %v1239
        %v1247 = vrot.slane %v1246, 4
        %v1248 = vadd.f32 %v1246, %v1247
        %v1249 = vrot.slane %v1248, 2
        %v1250 = vadd.f32 %v1248, %v1249
        %v1251 = vrot.slane %v1250, 1
        %v1252 = vadd.f32 %v1250, %v1251
        %v1253 = vmul.f32 %v1231, 0.015625
        %v1254 = vmul.f32 %v1252, 0.015625
        %v1255 = vmul.f32 %v1253, %v1253
        %v1256 = vsub.f32 %v1254, %v1255
        %v1257 = vmax.f32 %v1256, 0.0
        %v1258 = vsub.f32 %v1200, %v1253
        %v1259 = vsub.f32 %v1202, %v1253
        %v1260 = vsub.f32 %v1205, %v1253
        %v1261 = vsub.f32 %v1207, %v1253
        %v1262 = vsub.f32 %v1210, %v1253
        %v1263 = vsub.f32 %v1212, %v1253
        %v1264 = vsub.f32 %v1215, %v1253
        %v1265 = vsub.f32 %v1217, %v1253
        %v1266 = vadd.f32 %v1257, 1e-05
        %v1267 = vrsqrt.pop %v1266
        %v1268 = vmul.f32 %v1267, %v1266
        %v1269 = vmul.f32 %v1268, %v1267
        %v1270 = vmul.f32 0.5, %v1269
        %v1271 = vsub.f32 1.5, %v1270
        %v1272 = vmul.f32 %v1267, %v1271
        %vm1273 = vweird.f32 %v1266
        %vm1274 = vweird.f32 %v1267
        %vm1275 = vmor %vm1273, %vm1274
        %v1276 = vsel %vm1275, %v1267, %v1272
        %v1277 = vmul.f32 %v1258, %v1276
        %v1278 = vmul.f32 %v1259, %v1276
        %v1279 = vmul.f32 %v1260, %v1276
        %v1280 = vmul.f32 %v1261, %v1276
        %v1281 = vmul.f32 %v1262, %v1276
        %v1282 = vmul.f32 %v1263, %v1276
        %v1283 = vmul.f32 %v1264, %v1276
        %v1284 = vmul.f32 %v1265, %v1276
        %v1285 = vmax.f32 %v1277, 0.0
        %v1286 = vmax.f32 %v1278, 0.0
        %v1287 = vmax.f32 %v1279, 0.0
        %v1288 = vmax.f32 %v1280, 0.0
        %v1289 = vmax.f32 %v1281, 0.0
        %v1290 = vmax.f32 %v1282, 0.0
        %v1291 = vmax.f32 %v1283, 0.0
        %v1292 = vmax.f32 %v1284, 0.0
        %v1293 = vpack.c.bf16 %v1286, %v1285
        %v1294 = vpack.c.bf16 %v1288, %v1287
        %v1295 = vpack.c.bf16 %v1290, %v1289
        %v1296 = vpack.c.bf16 %v1292, %v1291
        %1297 = vmatpush.bf16.msra.mxu0 0
        %1298 = vmatpush.bf16.msra.mxu0 0
        %1299 = vmatpush.bf16.msra.mxu0 0
        %1300 = vmatpush.bf16.msra.mxu0 0
        %1301 = vmatpush.bf16.msra.mxu0 %v1296
        %1302 = vmatpush.bf16.msra.mxu0 %v1295
        %1303 = vmatpush.bf16.msra.mxu0 %v1294
        %1304 = vmatpush.bf16.msra.mxu0 %v1293
        %1305 = vmatmul.bf16.gmra.mxu0 %v262
        %v1306 = vpop.f32.mrf.mxu0
        %v1307 = vadd.f32 0.0, %v1306
        %v1308 = vpop.f32.mrf.mxu0
        %v1309 = vadd.f32 0.0, %v1308
        %1310 = vmatmul.bf16.gmra.mxu0 %v265
        %v1311 = vpop.f32.mrf.mxu0
        %v1312 = vadd.f32 0.0, %v1311
        %v1313 = vpop.f32.mrf.mxu0
        %v1314 = vadd.f32 0.0, %v1313
        %1315 = vmatmul.bf16.gmra.mxu0 %v268
        %v1316 = vpop.f32.mrf.mxu0
        %v1317 = vadd.f32 0.0, %v1316
        %v1318 = vpop.f32.mrf.mxu0
        %v1319 = vadd.f32 0.0, %v1318
        %1320 = vmatmul.bf16.gmra.mxu0 %v271
        %v1321 = vpop.f32.mrf.mxu0
        %v1322 = vadd.f32 0.0, %v1321
        %v1323 = vpop.f32.mrf.mxu0
        %v1324 = vadd.f32 0.0, %v1323
        %1325 = vdwg.mxu0
        %v1326 = vpack.c.bf16 %v1309, %v1307
        %v1327 = vpack.c.bf16 %v1314, %v1312
        %v1328 = vpack.c.bf16 %v1319, %v1317
        %v1329 = vpack.c.bf16 %v1324, %v1322
        %s1330 = scalar_lea.vmem %s2, 320
        %v1331 = vld [vmem:[%s1330] sm:$0xf]
        %v1332 = vld [vmem:[%s1330 + $0x4] sm:$0xf]
        %v1333 = vld [vmem:[%s1330 + $0x8] sm:$0xf]
        %v1334 = vld [vmem:[%s1330 + $0xc] sm:$0xf]
        %v1335 = vld [vmem:[%s1330 + $0x10] sm:$0xf]
        %v1336 = vld [vmem:[%s1330 + $0x14] sm:$0xf]
        %v1337 = vld [vmem:[%s1330 + $0x18] sm:$0xf]
        %v1338 = vld [vmem:[%s1330 + $0x1c] sm:$0xf]
        %v1339 = vld [vmem:[%s1330 + $0x20] sm:$0xf]
        %v1340 = vld [vmem:[%s1330 + $0x24] sm:$0xf]
        %v1341 = vld [vmem:[%s1330 + $0x28] sm:$0xf]
        %v1342 = vld [vmem:[%s1330 + $0x2c] sm:$0xf]
        %v1343 = vld [vmem:[%s1330 + $0x30] sm:$0xf]
        %v1344 = vld [vmem:[%s1330 + $0x34] sm:$0xf]
        %v1345 = vld [vmem:[%s1330 + $0x38] sm:$0xf]
        %v1346 = vld [vmem:[%s1330 + $0x3c] sm:$0xf]
        %v1363 = vunpack.c.l.b16 %v1331
        %v1364 = vunpack.c.l.b16 %v1332
        %v1365 = vunpack.c.l.b16 %v1333
        %v1366 = vunpack.c.l.b16 %v1334
        %v1367 = vunpack.c.l.b16 %v1335
        %v1368 = vunpack.c.l.b16 %v1336
        %v1369 = vunpack.c.l.b16 %v1337
        %v1370 = vunpack.c.l.b16 %v1338
        %v1371 = vunpack.c.l.b16 %v1339
        %v1372 = vunpack.c.l.b16 %v1340
        %v1373 = vunpack.c.l.b16 %v1341
        %v1374 = vunpack.c.l.b16 %v1342
        %v1375 = vunpack.c.l.b16 %v1343
        %v1376 = vunpack.c.l.b16 %v1344
        %v1377 = vunpack.c.l.b16 %v1345
        %v1378 = vunpack.c.l.b16 %v1346
        %v1379 = vpack.c.b16 %v1364, %v1363
        %v1380 = vpack.c.b16 %v1366, %v1365
        %v1381 = vpack.c.b16 %v1368, %v1367
        %v1382 = vpack.c.b16 %v1370, %v1369
        %v1383 = vpack.c.b16 %v1372, %v1371
        %v1384 = vpack.c.b16 %v1374, %v1373
        %v1385 = vpack.c.b16 %v1376, %v1375
        %v1386 = vpack.c.b16 %v1378, %v1377
        %1395 = vmatpush.bf16.msra.mxu0 %v1386
        %1396 = vmatpush.bf16.msra.mxu0 %v1385
        %1397 = vmatpush.bf16.msra.mxu0 %v1384
        %1398 = vmatpush.bf16.msra.mxu0 %v1383
        %1399 = vmatpush.bf16.msra.mxu0 %v1382
        %1400 = vmatpush.bf16.msra.mxu0 %v1381
        %1401 = vmatpush.bf16.msra.mxu0 %v1380
        %1402 = vmatpush.bf16.msra.mxu0 %v1379
        %1403 = vmatmul.bf16.gmra.mxu0 %v1326
        %v1404 = vpop.f32.mrf.mxu0
        %v1405 = vadd.f32 0.0, %v1404
        %v1406 = vpop.f32.mrf.mxu0
        %v1407 = vadd.f32 0.0, %v1406
        %1408 = vmatmul.bf16.gmra.mxu0 %v1327
        %v1409 = vpop.f32.mrf.mxu0
        %v1410 = vadd.f32 0.0, %v1409
        %v1411 = vpop.f32.mrf.mxu0
        %v1412 = vadd.f32 0.0, %v1411
        %1413 = vmatmul.bf16.gmra.mxu0 %v1328
        %v1414 = vpop.f32.mrf.mxu0
        %v1415 = vadd.f32 0.0, %v1414
        %v1416 = vpop.f32.mrf.mxu0
        %v1417 = vadd.f32 0.0, %v1416
        %1418 = vmatmul.bf16.gmra.mxu0 %v1329
        %v1419 = vpop.f32.mrf.mxu0
        %v1420 = vadd.f32 0.0, %v1419
        %v1421 = vpop.f32.mrf.mxu0
        %v1422 = vadd.f32 0.0, %v1421
        %1423 = vdwg.mxu0
        %v1424 = vadd.f32 %v1405, %v1407
        %v1425 = vadd.f32 %v1424, %v1410
        %v1426 = vadd.f32 %v1425, %v1412
        %v1427 = vadd.f32 %v1426, %v1415
        %v1428 = vadd.f32 %v1427, %v1417
        %v1429 = vadd.f32 %v1428, %v1420
        %v1430 = vadd.f32 %v1429, %v1422
        %v1431 = vrot.slane %v1430, 4
        %v1432 = vadd.f32 %v1430, %v1431
        %v1433 = vrot.slane %v1432, 2
        %v1434 = vadd.f32 %v1432, %v1433
        %v1435 = vrot.slane %v1434, 1
        %v1436 = vadd.f32 %v1434, %v1435
        %v1437 = vmul.f32 %v1405, %v1405
        %v1438 = vmul.f32 %v1407, %v1407
        %v1439 = vmul.f32 %v1410, %v1410
        %v1440 = vmul.f32 %v1412, %v1412
        %v1441 = vmul.f32 %v1415, %v1415
        %v1442 = vmul.f32 %v1417, %v1417
        %v1443 = vmul.f32 %v1420, %v1420
        %v1444 = vmul.f32 %v1422, %v1422
        %v1445 = vadd.f32 %v1437, %v1438
        %v1446 = vadd.f32 %v1445, %v1439
        %v1447 = vadd.f32 %v1446, %v1440
        %v1448 = vadd.f32 %v1447, %v1441
        %v1449 = vadd.f32 %v1448, %v1442
        %v1450 = vadd.f32 %v1449, %v1443
        %v1451 = vadd.f32 %v1450, %v1444
        %v1452 = vrot.slane %v1451, 4
        %v1453 = vadd.f32 %v1451, %v1452
        %v1454 = vrot.slane %v1453, 2
        %v1455 = vadd.f32 %v1453, %v1454
        %v1456 = vrot.slane %v1455, 1
        %v1457 = vadd.f32 %v1455, %v1456
        %v1458 = vmul.f32 %v1436, 0.015625
        %v1459 = vmul.f32 %v1457, 0.015625
        %v1460 = vmul.f32 %v1458, %v1458
        %v1461 = vsub.f32 %v1459, %v1460
        %v1462 = vmax.f32 %v1461, 0.0
        %v1463 = vsub.f32 %v1405, %v1458
        %v1464 = vsub.f32 %v1407, %v1458
        %v1465 = vsub.f32 %v1410, %v1458
        %v1466 = vsub.f32 %v1412, %v1458
        %v1467 = vsub.f32 %v1415, %v1458
        %v1468 = vsub.f32 %v1417, %v1458
        %v1469 = vsub.f32 %v1420, %v1458
        %v1470 = vsub.f32 %v1422, %v1458
        %v1471 = vadd.f32 %v1462, 1e-05
        %v1472 = vrsqrt.pop %v1471
        %v1473 = vmul.f32 %v1472, %v1471
        %v1474 = vmul.f32 %v1473, %v1472
        %v1475 = vmul.f32 0.5, %v1474
        %v1476 = vsub.f32 1.5, %v1475
        %v1477 = vmul.f32 %v1472, %v1476
        %vm1478 = vweird.f32 %v1471
        %vm1479 = vweird.f32 %v1472
        %vm1480 = vmor %vm1478, %vm1479
        %v1481 = vsel %vm1480, %v1472, %v1477
        %v1482 = vmul.f32 %v1463, %v1481
        %v1483 = vmul.f32 %v1464, %v1481
        %v1484 = vmul.f32 %v1465, %v1481
        %v1485 = vmul.f32 %v1466, %v1481
        %v1486 = vmul.f32 %v1467, %v1481
        %v1487 = vmul.f32 %v1468, %v1481
        %v1488 = vmul.f32 %v1469, %v1481
        %v1489 = vmul.f32 %v1470, %v1481
        %v1490 = vmax.f32 %v1482, 0.0
        %v1491 = vmax.f32 %v1483, 0.0
        %v1492 = vmax.f32 %v1484, 0.0
        %v1493 = vmax.f32 %v1485, 0.0
        %v1494 = vmax.f32 %v1486, 0.0
        %v1495 = vmax.f32 %v1487, 0.0
        %v1496 = vmax.f32 %v1488, 0.0
        %v1497 = vmax.f32 %v1489, 0.0
        %v1498 = vpack.c.bf16 %v1491, %v1490
        %v1499 = vpack.c.bf16 %v1493, %v1492
        %v1500 = vpack.c.bf16 %v1495, %v1494
        %v1501 = vpack.c.bf16 %v1497, %v1496
        %1502 = vmatpush.bf16.msra.mxu0 0
        %1503 = vmatpush.bf16.msra.mxu0 0
        %1504 = vmatpush.bf16.msra.mxu0 0
        %1505 = vmatpush.bf16.msra.mxu0 0
        %1506 = vmatpush.bf16.msra.mxu0 %v1501
        %1507 = vmatpush.bf16.msra.mxu0 %v1500
        %1508 = vmatpush.bf16.msra.mxu0 %v1499
        %1509 = vmatpush.bf16.msra.mxu0 %v1498
        %1510 = vmatmul.bf16.gmra.mxu0 %v262
        %v1511 = vpop.f32.mrf.mxu0
        %v1512 = vadd.f32 0.0, %v1511
        %v1513 = vpop.f32.mrf.mxu0
        %v1514 = vadd.f32 0.0, %v1513
        %1515 = vmatmul.bf16.gmra.mxu0 %v265
        %v1516 = vpop.f32.mrf.mxu0
        %v1517 = vadd.f32 0.0, %v1516
        %v1518 = vpop.f32.mrf.mxu0
        %v1519 = vadd.f32 0.0, %v1518
        %1520 = vmatmul.bf16.gmra.mxu0 %v268
        %v1521 = vpop.f32.mrf.mxu0
        %v1522 = vadd.f32 0.0, %v1521
        %v1523 = vpop.f32.mrf.mxu0
        %v1524 = vadd.f32 0.0, %v1523
        %1525 = vmatmul.bf16.gmra.mxu0 %v271
        %v1526 = vpop.f32.mrf.mxu0
        %v1527 = vadd.f32 0.0, %v1526
        %v1528 = vpop.f32.mrf.mxu0
        %v1529 = vadd.f32 0.0, %v1528
        %1530 = vdwg.mxu0
        %v1531 = vpack.c.bf16 %v1514, %v1512
        %v1532 = vpack.c.bf16 %v1519, %v1517
        %v1533 = vpack.c.bf16 %v1524, %v1522
        %v1534 = vpack.c.bf16 %v1529, %v1527
        %s1535 = scalar_lea.vmem %s2, 384
        %v1536 = vld [vmem:[%s1535] sm:$0xf]
        %v1537 = vld [vmem:[%s1535 + $0x4] sm:$0xf]
        %v1538 = vld [vmem:[%s1535 + $0x8] sm:$0xf]
        %v1539 = vld [vmem:[%s1535 + $0xc] sm:$0xf]
        %v1540 = vld [vmem:[%s1535 + $0x10] sm:$0xf]
        %v1541 = vld [vmem:[%s1535 + $0x14] sm:$0xf]
        %v1542 = vld [vmem:[%s1535 + $0x18] sm:$0xf]
        %v1543 = vld [vmem:[%s1535 + $0x1c] sm:$0xf]
        %v1544 = vld [vmem:[%s1535 + $0x20] sm:$0xf]
        %v1545 = vld [vmem:[%s1535 + $0x24] sm:$0xf]
        %v1546 = vld [vmem:[%s1535 + $0x28] sm:$0xf]
        %v1547 = vld [vmem:[%s1535 + $0x2c] sm:$0xf]
        %v1548 = vld [vmem:[%s1535 + $0x30] sm:$0xf]
        %v1549 = vld [vmem:[%s1535 + $0x34] sm:$0xf]
        %v1550 = vld [vmem:[%s1535 + $0x38] sm:$0xf]
        %v1551 = vld [vmem:[%s1535 + $0x3c] sm:$0xf]
        %v1568 = vunpack.c.l.b16 %v1536
        %v1569 = vunpack.c.l.b16 %v1537
        %v1570 = vunpack.c.l.b16 %v1538
        %v1571 = vunpack.c.l.b16 %v1539
        %v1572 = vunpack.c.l.b16 %v1540
        %v1573 = vunpack.c.l.b16 %v1541
        %v1574 = vunpack.c.l.b16 %v1542
        %v1575 = vunpack.c.l.b16 %v1543
        %v1576 = vunpack.c.l.b16 %v1544
        %v1577 = vunpack.c.l.b16 %v1545
        %v1578 = vunpack.c.l.b16 %v1546
        %v1579 = vunpack.c.l.b16 %v1547
        %v1580 = vunpack.c.l.b16 %v1548
        %v1581 = vunpack.c.l.b16 %v1549
        %v1582 = vunpack.c.l.b16 %v1550
        %v1583 = vunpack.c.l.b16 %v1551
        %v1584 = vpack.c.b16 %v1569, %v1568
        %v1585 = vpack.c.b16 %v1571, %v1570
        %v1586 = vpack.c.b16 %v1573, %v1572
        %v1587 = vpack.c.b16 %v1575, %v1574
        %v1588 = vpack.c.b16 %v1577, %v1576
        %v1589 = vpack.c.b16 %v1579, %v1578
        %v1590 = vpack.c.b16 %v1581, %v1580
        %v1591 = vpack.c.b16 %v1583, %v1582
        %1600 = vmatpush.bf16.msra.mxu0 %v1591
        %1601 = vmatpush.bf16.msra.mxu0 %v1590
        %1602 = vmatpush.bf16.msra.mxu0 %v1589
        %1603 = vmatpush.bf16.msra.mxu0 %v1588
        %1604 = vmatpush.bf16.msra.mxu0 %v1587
        %1605 = vmatpush.bf16.msra.mxu0 %v1586
        %1606 = vmatpush.bf16.msra.mxu0 %v1585
        %1607 = vmatpush.bf16.msra.mxu0 %v1584
        %1608 = vmatmul.bf16.gmra.mxu0 %v1531
        %v1609 = vpop.f32.mrf.mxu0
        %v1610 = vadd.f32 0.0, %v1609
        %v1611 = vpop.f32.mrf.mxu0
        %v1612 = vadd.f32 0.0, %v1611
        %1613 = vmatmul.bf16.gmra.mxu0 %v1532
        %v1614 = vpop.f32.mrf.mxu0
        %v1615 = vadd.f32 0.0, %v1614
        %v1616 = vpop.f32.mrf.mxu0
        %v1617 = vadd.f32 0.0, %v1616
        %1618 = vmatmul.bf16.gmra.mxu0 %v1533
        %v1619 = vpop.f32.mrf.mxu0
        %v1620 = vadd.f32 0.0, %v1619
        %v1621 = vpop.f32.mrf.mxu0
        %v1622 = vadd.f32 0.0, %v1621
        %1623 = vmatmul.bf16.gmra.mxu0 %v1534
        %v1624 = vpop.f32.mrf.mxu0
        %v1625 = vadd.f32 0.0, %v1624
        %v1626 = vpop.f32.mrf.mxu0
        %v1627 = vadd.f32 0.0, %v1626
        %1628 = vdwg.mxu0
        %v1629 = vadd.f32 %v1610, %v1612
        %v1630 = vadd.f32 %v1629, %v1615
        %v1631 = vadd.f32 %v1630, %v1617
        %v1632 = vadd.f32 %v1631, %v1620
        %v1633 = vadd.f32 %v1632, %v1622
        %v1634 = vadd.f32 %v1633, %v1625
        %v1635 = vadd.f32 %v1634, %v1627
        %v1636 = vrot.slane %v1635, 4
        %v1637 = vadd.f32 %v1635, %v1636
        %v1638 = vrot.slane %v1637, 2
        %v1639 = vadd.f32 %v1637, %v1638
        %v1640 = vrot.slane %v1639, 1
        %v1641 = vadd.f32 %v1639, %v1640
        %v1642 = vmul.f32 %v1610, %v1610
        %v1643 = vmul.f32 %v1612, %v1612
        %v1644 = vmul.f32 %v1615, %v1615
        %v1645 = vmul.f32 %v1617, %v1617
        %v1646 = vmul.f32 %v1620, %v1620
        %v1647 = vmul.f32 %v1622, %v1622
        %v1648 = vmul.f32 %v1625, %v1625
        %v1649 = vmul.f32 %v1627, %v1627
        %v1650 = vadd.f32 %v1642, %v1643
        %v1651 = vadd.f32 %v1650, %v1644
        %v1652 = vadd.f32 %v1651, %v1645
        %v1653 = vadd.f32 %v1652, %v1646
        %v1654 = vadd.f32 %v1653, %v1647
        %v1655 = vadd.f32 %v1654, %v1648
        %v1656 = vadd.f32 %v1655, %v1649
        %v1657 = vrot.slane %v1656, 4
        %v1658 = vadd.f32 %v1656, %v1657
        %v1659 = vrot.slane %v1658, 2
        %v1660 = vadd.f32 %v1658, %v1659
        %v1661 = vrot.slane %v1660, 1
        %v1662 = vadd.f32 %v1660, %v1661
        %v1663 = vmul.f32 %v1641, 0.015625
        %v1664 = vmul.f32 %v1662, 0.015625
        %v1665 = vmul.f32 %v1663, %v1663
        %v1666 = vsub.f32 %v1664, %v1665
        %v1667 = vmax.f32 %v1666, 0.0
        %v1668 = vsub.f32 %v1610, %v1663
        %v1669 = vsub.f32 %v1612, %v1663
        %v1670 = vsub.f32 %v1615, %v1663
        %v1671 = vsub.f32 %v1617, %v1663
        %v1672 = vsub.f32 %v1620, %v1663
        %v1673 = vsub.f32 %v1622, %v1663
        %v1674 = vsub.f32 %v1625, %v1663
        %v1675 = vsub.f32 %v1627, %v1663
        %v1676 = vadd.f32 %v1667, 1e-05
        %v1677 = vrsqrt.pop %v1676
        %v1678 = vmul.f32 %v1677, %v1676
        %v1679 = vmul.f32 %v1678, %v1677
        %v1680 = vmul.f32 0.5, %v1679
        %v1681 = vsub.f32 1.5, %v1680
        %v1682 = vmul.f32 %v1677, %v1681
        %vm1683 = vweird.f32 %v1676
        %vm1684 = vweird.f32 %v1677
        %vm1685 = vmor %vm1683, %vm1684
        %v1686 = vsel %vm1685, %v1677, %v1682
        %v1687 = vmul.f32 %v1668, %v1686
        %v1688 = vmul.f32 %v1669, %v1686
        %v1689 = vmul.f32 %v1670, %v1686
        %v1690 = vmul.f32 %v1671, %v1686
        %v1691 = vmul.f32 %v1672, %v1686
        %v1692 = vmul.f32 %v1673, %v1686
        %v1693 = vmul.f32 %v1674, %v1686
        %v1694 = vmul.f32 %v1675, %v1686
        %v1695 = vmax.f32 %v1687, 0.0
        %v1696 = vmax.f32 %v1688, 0.0
        %v1697 = vmax.f32 %v1689, 0.0
        %v1698 = vmax.f32 %v1690, 0.0
        %v1699 = vmax.f32 %v1691, 0.0
        %v1700 = vmax.f32 %v1692, 0.0
        %v1701 = vmax.f32 %v1693, 0.0
        %v1702 = vmax.f32 %v1694, 0.0
        %v1703 = vpack.c.bf16 %v1696, %v1695
        %v1704 = vpack.c.bf16 %v1698, %v1697
        %v1705 = vpack.c.bf16 %v1700, %v1699
        %v1706 = vpack.c.bf16 %v1702, %v1701
        %1707 = vmatpush.bf16.msra.mxu0 0
        %1708 = vmatpush.bf16.msra.mxu0 0
        %1709 = vmatpush.bf16.msra.mxu0 0
        %1710 = vmatpush.bf16.msra.mxu0 0
        %1711 = vmatpush.bf16.msra.mxu0 %v1706
        %1712 = vmatpush.bf16.msra.mxu0 %v1705
        %1713 = vmatpush.bf16.msra.mxu0 %v1704
        %1714 = vmatpush.bf16.msra.mxu0 %v1703
        %1715 = vmatmul.bf16.gmra.mxu0 %v262
        %v1716 = vpop.f32.mrf.mxu0
        %v1717 = vadd.f32 0.0, %v1716
        %v1718 = vpop.f32.mrf.mxu0
        %v1719 = vadd.f32 0.0, %v1718
        %1720 = vmatmul.bf16.gmra.mxu0 %v265
        %v1721 = vpop.f32.mrf.mxu0
        %v1722 = vadd.f32 0.0, %v1721
        %v1723 = vpop.f32.mrf.mxu0
        %v1724 = vadd.f32 0.0, %v1723
        %1725 = vmatmul.bf16.gmra.mxu0 %v268
        %v1726 = vpop.f32.mrf.mxu0
        %v1727 = vadd.f32 0.0, %v1726
        %v1728 = vpop.f32.mrf.mxu0
        %v1729 = vadd.f32 0.0, %v1728
        %1730 = vmatmul.bf16.gmra.mxu0 %v271
        %v1731 = vpop.f32.mrf.mxu0
        %v1732 = vadd.f32 0.0, %v1731
        %v1733 = vpop.f32.mrf.mxu0
        %v1734 = vadd.f32 0.0, %v1733
        %1735 = vdwg.mxu0
        %v1736 = vpack.c.bf16 %v1719, %v1717
        %v1737 = vpack.c.bf16 %v1724, %v1722
        %v1738 = vpack.c.bf16 %v1729, %v1727
        %v1739 = vpack.c.bf16 %v1734, %v1732
        %s1740 = scalar_lea.vmem %s2, 448
        %v1741 = vld [vmem:[%s1740] sm:$0xf]
        %v1742 = vld [vmem:[%s1740 + $0x4] sm:$0xf]
        %v1743 = vld [vmem:[%s1740 + $0x8] sm:$0xf]
        %v1744 = vld [vmem:[%s1740 + $0xc] sm:$0xf]
        %v1745 = vld [vmem:[%s1740 + $0x10] sm:$0xf]
        %v1746 = vld [vmem:[%s1740 + $0x14] sm:$0xf]
        %v1747 = vld [vmem:[%s1740 + $0x18] sm:$0xf]
        %v1748 = vld [vmem:[%s1740 + $0x1c] sm:$0xf]
        %v1749 = vld [vmem:[%s1740 + $0x20] sm:$0xf]
        %v1750 = vld [vmem:[%s1740 + $0x24] sm:$0xf]
        %v1751 = vld [vmem:[%s1740 + $0x28] sm:$0xf]
        %v1752 = vld [vmem:[%s1740 + $0x2c] sm:$0xf]
        %v1753 = vld [vmem:[%s1740 + $0x30] sm:$0xf]
        %v1754 = vld [vmem:[%s1740 + $0x34] sm:$0xf]
        %v1755 = vld [vmem:[%s1740 + $0x38] sm:$0xf]
        %v1756 = vld [vmem:[%s1740 + $0x3c] sm:$0xf]
        %v1773 = vunpack.c.l.b16 %v1741
        %v1774 = vunpack.c.l.b16 %v1742
        %v1775 = vunpack.c.l.b16 %v1743
        %v1776 = vunpack.c.l.b16 %v1744
        %v1777 = vunpack.c.l.b16 %v1745
        %v1778 = vunpack.c.l.b16 %v1746
        %v1779 = vunpack.c.l.b16 %v1747
        %v1780 = vunpack.c.l.b16 %v1748
        %v1781 = vunpack.c.l.b16 %v1749
        %v1782 = vunpack.c.l.b16 %v1750
        %v1783 = vunpack.c.l.b16 %v1751
        %v1784 = vunpack.c.l.b16 %v1752
        %v1785 = vunpack.c.l.b16 %v1753
        %v1786 = vunpack.c.l.b16 %v1754
        %v1787 = vunpack.c.l.b16 %v1755
        %v1788 = vunpack.c.l.b16 %v1756
        %v1789 = vpack.c.b16 %v1774, %v1773
        %v1790 = vpack.c.b16 %v1776, %v1775
        %v1791 = vpack.c.b16 %v1778, %v1777
        %v1792 = vpack.c.b16 %v1780, %v1779
        %v1793 = vpack.c.b16 %v1782, %v1781
        %v1794 = vpack.c.b16 %v1784, %v1783
        %v1795 = vpack.c.b16 %v1786, %v1785
        %v1796 = vpack.c.b16 %v1788, %v1787
        %1805 = vmatpush.bf16.msra.mxu0 %v1796
        %1806 = vmatpush.bf16.msra.mxu0 %v1795
        %1807 = vmatpush.bf16.msra.mxu0 %v1794
        %1808 = vmatpush.bf16.msra.mxu0 %v1793
        %1809 = vmatpush.bf16.msra.mxu0 %v1792
        %1810 = vmatpush.bf16.msra.mxu0 %v1791
        %1811 = vmatpush.bf16.msra.mxu0 %v1790
        %1812 = vmatpush.bf16.msra.mxu0 %v1789
        %1813 = vmatmul.bf16.gmra.mxu0 %v1736
        %v1814 = vpop.f32.mrf.mxu0
        %v1815 = vadd.f32 0.0, %v1814
        %v1816 = vpop.f32.mrf.mxu0
        %v1817 = vadd.f32 0.0, %v1816
        %1818 = vmatmul.bf16.gmra.mxu0 %v1737
        %v1819 = vpop.f32.mrf.mxu0
        %v1820 = vadd.f32 0.0, %v1819
        %v1821 = vpop.f32.mrf.mxu0
        %v1822 = vadd.f32 0.0, %v1821
        %1823 = vmatmul.bf16.gmra.mxu0 %v1738
        %v1824 = vpop.f32.mrf.mxu0
        %v1825 = vadd.f32 0.0, %v1824
        %v1826 = vpop.f32.mrf.mxu0
        %v1827 = vadd.f32 0.0, %v1826
        %1828 = vmatmul.bf16.gmra.mxu0 %v1739
        %v1829 = vpop.f32.mrf.mxu0
        %v1830 = vadd.f32 0.0, %v1829
        %v1831 = vpop.f32.mrf.mxu0
        %v1832 = vadd.f32 0.0, %v1831
        %1833 = vdwg.mxu0
        %v1834 = vadd.f32 %v1815, %v1817
        %v1835 = vadd.f32 %v1834, %v1820
        %v1836 = vadd.f32 %v1835, %v1822
        %v1837 = vadd.f32 %v1836, %v1825
        %v1838 = vadd.f32 %v1837, %v1827
        %v1839 = vadd.f32 %v1838, %v1830
        %v1840 = vadd.f32 %v1839, %v1832
        %v1841 = vrot.slane %v1840, 4
        %v1842 = vadd.f32 %v1840, %v1841
        %v1843 = vrot.slane %v1842, 2
        %v1844 = vadd.f32 %v1842, %v1843
        %v1845 = vrot.slane %v1844, 1
        %v1846 = vadd.f32 %v1844, %v1845
        %v1847 = vmul.f32 %v1815, %v1815
        %v1848 = vmul.f32 %v1817, %v1817
        %v1849 = vmul.f32 %v1820, %v1820
        %v1850 = vmul.f32 %v1822, %v1822
        %v1851 = vmul.f32 %v1825, %v1825
        %v1852 = vmul.f32 %v1827, %v1827
        %v1853 = vmul.f32 %v1830, %v1830
        %v1854 = vmul.f32 %v1832, %v1832
        %v1855 = vadd.f32 %v1847, %v1848
        %v1856 = vadd.f32 %v1855, %v1849
        %v1857 = vadd.f32 %v1856, %v1850
        %v1858 = vadd.f32 %v1857, %v1851
        %v1859 = vadd.f32 %v1858, %v1852
        %v1860 = vadd.f32 %v1859, %v1853
        %v1861 = vadd.f32 %v1860, %v1854
        %v1862 = vrot.slane %v1861, 4
        %v1863 = vadd.f32 %v1861, %v1862
        %v1864 = vrot.slane %v1863, 2
        %v1865 = vadd.f32 %v1863, %v1864
        %v1866 = vrot.slane %v1865, 1
        %v1867 = vadd.f32 %v1865, %v1866
        %v1868 = vmul.f32 %v1846, 0.015625
        %v1869 = vmul.f32 %v1867, 0.015625
        %v1870 = vmul.f32 %v1868, %v1868
        %v1871 = vsub.f32 %v1869, %v1870
        %v1872 = vmax.f32 %v1871, 0.0
        %v1873 = vsub.f32 %v1815, %v1868
        %v1874 = vsub.f32 %v1817, %v1868
        %v1875 = vsub.f32 %v1820, %v1868
        %v1876 = vsub.f32 %v1822, %v1868
        %v1877 = vsub.f32 %v1825, %v1868
        %v1878 = vsub.f32 %v1827, %v1868
        %v1879 = vsub.f32 %v1830, %v1868
        %v1880 = vsub.f32 %v1832, %v1868
        %v1881 = vadd.f32 %v1872, 1e-05
        %v1882 = vrsqrt.pop %v1881
        %v1883 = vmul.f32 %v1882, %v1881
        %v1884 = vmul.f32 %v1883, %v1882
        %v1885 = vmul.f32 0.5, %v1884
        %v1886 = vsub.f32 1.5, %v1885
        %v1887 = vmul.f32 %v1882, %v1886
        %vm1888 = vweird.f32 %v1881
        %vm1889 = vweird.f32 %v1882
        %vm1890 = vmor %vm1888, %vm1889
        %v1891 = vsel %vm1890, %v1882, %v1887
        %v1892 = vmul.f32 %v1873, %v1891
        %v1893 = vmul.f32 %v1874, %v1891
        %v1894 = vmul.f32 %v1875, %v1891
        %v1895 = vmul.f32 %v1876, %v1891
        %v1896 = vmul.f32 %v1877, %v1891
        %v1897 = vmul.f32 %v1878, %v1891
        %v1898 = vmul.f32 %v1879, %v1891
        %v1899 = vmul.f32 %v1880, %v1891
        %v1900 = vmax.f32 %v1892, 0.0
        %v1901 = vmax.f32 %v1893, 0.0
        %v1902 = vmax.f32 %v1894, 0.0
        %v1903 = vmax.f32 %v1895, 0.0
        %v1904 = vmax.f32 %v1896, 0.0
        %v1905 = vmax.f32 %v1897, 0.0
        %v1906 = vmax.f32 %v1898, 0.0
        %v1907 = vmax.f32 %v1899, 0.0
        %v1908 = vpack.c.bf16 %v1901, %v1900
        %v1909 = vpack.c.bf16 %v1903, %v1902
        %v1910 = vpack.c.bf16 %v1905, %v1904
        %v1911 = vpack.c.bf16 %v1907, %v1906
        %1912 = vmatpush.bf16.msra.mxu0 0
        %1913 = vmatpush.bf16.msra.mxu0 0
        %1914 = vmatpush.bf16.msra.mxu0 0
        %1915 = vmatpush.bf16.msra.mxu0 0
        %1916 = vmatpush.bf16.msra.mxu0 %v1911
        %1917 = vmatpush.bf16.msra.mxu0 %v1910
        %1918 = vmatpush.bf16.msra.mxu0 %v1909
        %1919 = vmatpush.bf16.msra.mxu0 %v1908
        %1920 = vmatmul.bf16.gmra.mxu0 %v262
        %v1921 = vpop.f32.mrf.mxu0
        %v1922 = vadd.f32 0.0, %v1921
        %v1923 = vpop.f32.mrf.mxu0
        %v1924 = vadd.f32 0.0, %v1923
        %1925 = vmatmul.bf16.gmra.mxu0 %v265
        %v1926 = vpop.f32.mrf.mxu0
        %v1927 = vadd.f32 0.0, %v1926
        %v1928 = vpop.f32.mrf.mxu0
        %v1929 = vadd.f32 0.0, %v1928
        %1930 = vmatmul.bf16.gmra.mxu0 %v268
        %v1931 = vpop.f32.mrf.mxu0
        %v1932 = vadd.f32 0.0, %v1931
        %v1933 = vpop.f32.mrf.mxu0
        %v1934 = vadd.f32 0.0, %v1933
        %1935 = vmatmul.bf16.gmra.mxu0 %v271
        %v1936 = vpop.f32.mrf.mxu0
        %v1937 = vadd.f32 0.0, %v1936
        %v1938 = vpop.f32.mrf.mxu0
        %v1939 = vadd.f32 0.0, %v1938
        %1940 = vdwg.mxu0
        %v1941 = vpack.c.bf16 %v1924, %v1922
        %v1942 = vpack.c.bf16 %v1929, %v1927
        %v1943 = vpack.c.bf16 %v1934, %v1932
        %v1944 = vpack.c.bf16 %v1939, %v1937
        %v1945 = vld [vmem:[#allocation2] sm:$0xff]
        %v1946 = vld [vmem:[#allocation2 + $0x8] sm:$0xf]
        %v1947 = vld [vmem:[#allocation2 + $0xc] sm:$0xff]
        %v1948 = vld [vmem:[#allocation2 + $0x14] sm:$0xf]
        %v1949 = vld [vmem:[#allocation2 + $0x18] sm:$0xff]
        %v1950 = vld [vmem:[#allocation2 + $0x20] sm:$0xf]
        %v1951 = vld [vmem:[#allocation2 + $0x24] sm:$0xff]
        %v1952 = vld [vmem:[#allocation2 + $0x2c] sm:$0xf]
        %v1953 = vld [vmem:[#allocation2 + $0x30] sm:$0xff]
        %v1954 = vld [vmem:[#allocation2 + $0x38] sm:$0xf]
        %v1955 = vld [vmem:[#allocation2 + $0x3c] sm:$0xff]
        %v1956 = vld [vmem:[#allocation2 + $0x44] sm:$0xf]
        %v1957 = vld [vmem:[#allocation2 + $0x48] sm:$0xff]
        %v1958 = vld [vmem:[#allocation2 + $0x50] sm:$0xf]
        %v1959 = vld [vmem:[#allocation2 + $0x54] sm:$0xff]
        %v1960 = vld [vmem:[#allocation2 + $0x5c] sm:$0xf]
        %v1961 = vld [vmem:[#allocation2 + $0x60] sm:$0xff]
        %v1962 = vld [vmem:[#allocation2 + $0x68] sm:$0xf]
        %v1963 = vld [vmem:[#allocation2 + $0x6c] sm:$0xff]
        %v1964 = vld [vmem:[#allocation2 + $0x74] sm:$0xf]
        %v1965 = vld [vmem:[#allocation2 + $0x78] sm:$0xff]
        %v1966 = vld [vmem:[#allocation2 + $0x80] sm:$0xf]
        %v1967 = vld [vmem:[#allocation2 + $0x84] sm:$0xff]
        %v1968 = vld [vmem:[#allocation2 + $0x8c] sm:$0xf]
        %v1969 = vld [vmem:[#allocation2 + $0x90] sm:$0xff]
        %v1970 = vld [vmem:[#allocation2 + $0x98] sm:$0xf]
        %v1971 = vld [vmem:[#allocation2 + $0x9c] sm:$0xff]
        %v1972 = vld [vmem:[#allocation2 + $0xa4] sm:$0xf]
        %v1973 = vld [vmem:[#allocation2 + $0xa8] sm:$0xff]
        %v1974 = vld [vmem:[#allocation2 + $0xb0] sm:$0xf]
        %v1975 = vld [vmem:[#allocation2 + $0xb4] sm:$0xff]
        %v1976 = vld [vmem:[#allocation2 + $0xbc] sm:$0xf]
        %v2009 = vunpack.c.l.b16 %v1945
        %v2010 = vunpack.c.h.b16 %v1945
        %v2011 = vunpack.c.l.b16 %v1946
        %v2012 = vunpack.c.l.b16 %v1947
        %v2013 = vunpack.c.h.b16 %v1947
        %v2014 = vunpack.c.l.b16 %v1948
        %v2015 = vunpack.c.l.b16 %v1949
        %v2016 = vunpack.c.h.b16 %v1949
        %v2017 = vunpack.c.l.b16 %v1950
        %v2018 = vunpack.c.l.b16 %v1951
        %v2019 = vunpack.c.h.b16 %v1951
        %v2020 = vunpack.c.l.b16 %v1952
        %v2021 = vunpack.c.l.b16 %v1953
        %v2022 = vunpack.c.h.b16 %v1953
        %v2023 = vunpack.c.l.b16 %v1954
        %v2024 = vunpack.c.l.b16 %v1955
        %v2025 = vunpack.c.h.b16 %v1955
        %v2026 = vunpack.c.l.b16 %v1956
        %v2027 = vunpack.c.l.b16 %v1957
        %v2028 = vunpack.c.h.b16 %v1957
        %v2029 = vunpack.c.l.b16 %v1958
        %v2030 = vunpack.c.l.b16 %v1959
        %v2031 = vunpack.c.h.b16 %v1959
        %v2032 = vunpack.c.l.b16 %v1960
        %v2033 = vunpack.c.l.b16 %v1961
        %v2034 = vunpack.c.h.b16 %v1961
        %v2035 = vunpack.c.l.b16 %v1962
        %v2036 = vunpack.c.l.b16 %v1963
        %v2037 = vunpack.c.h.b16 %v1963
        %v2038 = vunpack.c.l.b16 %v1964
        %v2039 = vunpack.c.l.b16 %v1965
        %v2040 = vunpack.c.h.b16 %v1965
        %v2041 = vunpack.c.l.b16 %v1966
        %v2042 = vunpack.c.l.b16 %v1967
        %v2043 = vunpack.c.h.b16 %v1967
        %v2044 = vunpack.c.l.b16 %v1968
        %v2045 = vunpack.c.l.b16 %v1969
        %v2046 = vunpack.c.h.b16 %v1969
        %v2047 = vunpack.c.l.b16 %v1970
        %v2048 = vunpack.c.l.b16 %v1971
        %v2049 = vunpack.c.h.b16 %v1971
        %v2050 = vunpack.c.l.b16 %v1972
        %v2051 = vunpack.c.l.b16 %v1973
        %v2052 = vunpack.c.h.b16 %v1973
        %v2053 = vunpack.c.l.b16 %v1974
        %v2054 = vunpack.c.l.b16 %v1975
        %v2055 = vunpack.c.h.b16 %v1975
        %v2056 = vunpack.c.l.b16 %v1976
        %v2057 = vpack.c.b16 %v2012, %v2009
        %v2058 = vpack.c.b16 %v2013, %v2010
        %v2059 = vpack.c.b16 %v2014, %v2011
        %v2060 = vpack.c.b16 %v2018, %v2015
        %v2061 = vpack.c.b16 %v2019, %v2016
        %v2062 = vpack.c.b16 %v2020, %v2017
        %v2063 = vpack.c.b16 %v2024, %v2021
        %v2064 = vpack.c.b16 %v2025, %v2022
        %v2065 = vpack.c.b16 %v2026, %v2023
        %v2066 = vpack.c.b16 %v2030, %v2027
        %v2067 = vpack.c.b16 %v2031, %v2028
        %v2068 = vpack.c.b16 %v2032, %v2029
        %v2069 = vpack.c.b16 %v2036, %v2033
        %v2070 = vpack.c.b16 %v2037, %v2034
        %v2071 = vpack.c.b16 %v2038, %v2035
        %v2072 = vpack.c.b16 %v2042, %v2039
        %v2073 = vpack.c.b16 %v2043, %v2040
        %v2074 = vpack.c.b16 %v2044, %v2041
        %v2075 = vpack.c.b16 %v2048, %v2045
        %v2076 = vpack.c.b16 %v2049, %v2046
        %v2077 = vpack.c.b16 %v2050, %v2047
        %v2078 = vpack.c.b16 %v2054, %v2051
        %v2079 = vpack.c.b16 %v2055, %v2052
        %v2080 = vpack.c.b16 %v2056, %v2053
        %2105 = vmatpush.bf16.msra.mxu0 %v2078
        %2106 = vmatpush.bf16.msra.mxu0 %v2075
        %2107 = vmatpush.bf16.msra.mxu0 %v2072
        %2108 = vmatpush.bf16.msra.mxu0 %v2069
        %2109 = vmatpush.bf16.msra.mxu0 %v2066
        %2110 = vmatpush.bf16.msra.mxu0 %v2063
        %2111 = vmatpush.bf16.msra.mxu0 %v2060
        %2112 = vmatpush.bf16.msra.mxu0 %v2057
        %2113 = vmatmul.bf16.gmra.mxu0 %v1941
        %v2114 = vpop.f32.mrf.mxu0
        %v2115 = vadd.f32 0.0, %v2114
        %v2116 = vpop.f32.mrf.mxu0
        %v2117 = vadd.f32 0.0, %v2116
        %2118 = vmatmul.bf16.gmra.mxu0 %v1942
        %v2119 = vpop.f32.mrf.mxu0
        %v2120 = vadd.f32 0.0, %v2119
        %v2121 = vpop.f32.mrf.mxu0
        %v2122 = vadd.f32 0.0, %v2121
        %2123 = vmatmul.bf16.gmra.mxu0 %v1943
        %v2124 = vpop.f32.mrf.mxu0
        %v2125 = vadd.f32 0.0, %v2124
        %v2126 = vpop.f32.mrf.mxu0
        %v2127 = vadd.f32 0.0, %v2126
        %2128 = vmatmul.bf16.gmra.mxu0 %v1944
        %v2129 = vpop.f32.mrf.mxu0
        %v2130 = vadd.f32 0.0, %v2129
        %v2131 = vpop.f32.mrf.mxu0
        %v2132 = vadd.f32 0.0, %v2131
        %2133 = vdwg.mxu0
        %2134 = vmatpush.bf16.msra.mxu0 %v2079
        %2135 = vmatpush.bf16.msra.mxu0 %v2076
        %2136 = vmatpush.bf16.msra.mxu0 %v2073
        %2137 = vmatpush.bf16.msra.mxu0 %v2070
        %2138 = vmatpush.bf16.msra.mxu0 %v2067
        %2139 = vmatpush.bf16.msra.mxu0 %v2064
        %2140 = vmatpush.bf16.msra.mxu0 %v2061
        %2141 = vmatpush.bf16.msra.mxu0 %v2058
        %2142 = vmatmul.bf16.gmra.mxu0 %v1941
        %v2143 = vpop.f32.mrf.mxu0
        %v2144 = vadd.f32 0.0, %v2143
        %v2145 = vpop.f32.mrf.mxu0
        %v2146 = vadd.f32 0.0, %v2145
        %2147 = vmatmul.bf16.gmra.mxu0 %v1942
        %v2148 = vpop.f32.mrf.mxu0
        %v2149 = vadd.f32 0.0, %v2148
        %v2150 = vpop.f32.mrf.mxu0
        %v2151 = vadd.f32 0.0, %v2150
        %2152 = vmatmul.bf16.gmra.mxu0 %v1943
        %v2153 = vpop.f32.mrf.mxu0
        %v2154 = vadd.f32 0.0, %v2153
        %v2155 = vpop.f32.mrf.mxu0
        %v2156 = vadd.f32 0.0, %v2155
        %2157 = vmatmul.bf16.gmra.mxu0 %v1944
        %v2158 = vpop.f32.mrf.mxu0
        %v2159 = vadd.f32 0.0, %v2158
        %v2160 = vpop.f32.mrf.mxu0
        %v2161 = vadd.f32 0.0, %v2160
        %2162 = vdwg.mxu0
        %2163 = vmatpush.bf16.msra.mxu0 %v2080
        %2164 = vmatpush.bf16.msra.mxu0 %v2077
        %2165 = vmatpush.bf16.msra.mxu0 %v2074
        %2166 = vmatpush.bf16.msra.mxu0 %v2071
        %2167 = vmatpush.bf16.msra.mxu0 %v2068
        %2168 = vmatpush.bf16.msra.mxu0 %v2065
        %2169 = vmatpush.bf16.msra.mxu0 %v2062
        %2170 = vmatpush.bf16.msra.mxu0 %v2059
        %2171 = vmatmul.bf16.gmra.mxu0 %v1941
        %v2172 = vpop.f32.mrf.mxu0
        %v2173 = vadd.f32 0.0, %v2172
        %v2174 = vpop.f32.mrf.mxu0
        %v2175 = vadd.f32 0.0, %v2174
        %2176 = vmatmul.bf16.gmra.mxu0 %v1942
        %v2177 = vpop.f32.mrf.mxu0
        %v2178 = vadd.f32 0.0, %v2177
        %v2179 = vpop.f32.mrf.mxu0
        %v2180 = vadd.f32 0.0, %v2179
        %2181 = vmatmul.bf16.gmra.mxu0 %v1943
        %v2182 = vpop.f32.mrf.mxu0
        %v2183 = vadd.f32 0.0, %v2182
        %v2184 = vpop.f32.mrf.mxu0
        %v2185 = vadd.f32 0.0, %v2184
        %2186 = vmatmul.bf16.gmra.mxu0 %v1944
        %v2187 = vpop.f32.mrf.mxu0
        %v2188 = vadd.f32 0.0, %v2187
        %v2189 = vpop.f32.mrf.mxu0
        %v2190 = vadd.f32 0.0, %v2189
        %2191 = vdwg.mxu0
        %2192 = vst [vmem:[%s234] sm:$0xff] %v2115
        %2193 = vst [vmem:[%s234 + $0x8] sm:$0xff] %v2144
        %2194 = vst [vmem:[%s234 + $0x10] sm:$0xff] %v2173
        %2195 = vst [vmem:[%s234 + $0x18] sm:$0xff] %v2117
        %2196 = vst [vmem:[%s234 + $0x20] sm:$0xff] %v2146
        %2197 = vst [vmem:[%s234 + $0x28] sm:$0xff] %v2175
        %2198 = vst [vmem:[%s234 + $0x30] sm:$0xff] %v2120
        %2199 = vst [vmem:[%s234 + $0x38] sm:$0xff] %v2149
        %2200 = vst [vmem:[%s234 + $0x40] sm:$0xff] %v2178
        %2201 = vst [vmem:[%s234 + $0x48] sm:$0xff] %v2122
        %2202 = vst [vmem:[%s234 + $0x50] sm:$0xff] %v2151
        %2203 = vst [vmem:[%s234 + $0x58] sm:$0xff] %v2180
        %2204 = vst [vmem:[%s234 + $0x60] sm:$0xff] %v2125
        %2205 = vst [vmem:[%s234 + $0x68] sm:$0xff] %v2154
        %2206 = vst [vmem:[%s234 + $0x70] sm:$0xff] %v2183
        %2207 = vst [vmem:[%s234 + $0x78] sm:$0xff] %v2127
        %2208 = vst [vmem:[%s234 + $0x80] sm:$0xff] %v2156
        %2209 = vst [vmem:[%s234 + $0x88] sm:$0xff] %v2185
        %2210 = vst [vmem:[%s234 + $0x90] sm:$0xff] %v2130
        %2211 = vst [vmem:[%s234 + $0x98] sm:$0xff] %v2159
        %2212 = vst [vmem:[%s234 + $0xa0] sm:$0xff] %v2188
        %2213 = vst [vmem:[%s234 + $0xa8] sm:$0xff] %v2132
        %2214 = vst [vmem:[%s234 + $0xb0] sm:$0xff] %v2161
        %2215 = vst [vmem:[%s234 + $0xb8] sm:$0xff] %v2190
        %p2216 = scmp.lt.s32.totalorder %s16, 3
        %s2217 = scalar_select %p2216, %s16, 3
        %s2218 = smul.addr %s2217, 24
        %s2219 = smul.addr %s2218, 8
        %s2220 = scalar_lea.vmem %s4, %s2219
        // Predicated region
        $region41: #{vencoder_forward_batched.1} parent=35 // pred_check
          %p2221 = pneg %p128
        $region42: #{vencoder_forward_batched.1} parent=35 // pred_check_branch
          %2223 = sbr.rel (%p2221) target = $region44
        $region43: #{vencoder_forward_batched.1} parent=35 // pred_region
          _
        $region44: #{vencoder_forward_batched.1} parent=35 // pred_fallthru
          _
      $region36: #{vencoder_forward_batched.1} parent=5 // pred_fallthru
        _
      %p2224 = scmp.le.s32.totalorder 2, %s11
      // Predicated region
      $region45: #{vencoder_forward_batched.1} parent=5 // pred_check
        %p2225 = pneg %p2224
      $region46: #{vencoder_forward_batched.1} parent=5 // pred_check_branch
        %2227 = sbr.rel (%p2225) target = $region48
      $region47: #{vencoder_forward_batched.1} parent=5 // pred_region
        %s2228 = ssub.s32 %s11, 2
        // Predicated region
        $region49: #{vencoder_forward_batched.1} parent=47 // pred_check
          %p2229 = pneg %p134
        $region50: #{vencoder_forward_batched.1} parent=47 // pred_check_branch
          %2231 = sbr.rel (%p2229) target = $region52
        $region51: #{vencoder_forward_batched.1} parent=47 // pred_region
          %p2232 = scmp.lt.s32.totalorder %s17, 3
          %s2233 = scalar_select %p2232, %s17, 3
          %s2234 = smul.addr %s2233, 24
          %s2235 = smul.addr %s2234, 8
          %s2236 = scalar_lea.vmem %s4, %s2235
        $region52: #{vencoder_forward_batched.1} parent=47 // pred_fallthru
          _
      $region48: #{vencoder_forward_batched.1} parent=5 // pred_fallthru
        _
    $region6: #{vencoder_forward_batched.1} parent=1 // loop_footer
      %s15 = sadd.s32 1, %s11
    $region7: #{vencoder_forward_batched.1} parent=1 // loop_footer_branch
      %10 = sbr.rel target = $region3
    $region8: #{vencoder_forward_batched.1} parent=1 // loop_exit
      _
    %2237 = vsyncpa [#allocation3], 1
    %s2238 = scalar_lea.sflag [#allocation3], 1
    %2239 = vsyncpa %s2238, 1

</llo_original>
